<compile_context>
chip_gen: v7x
topology: tpu7x:2x2x1
jax: 0.10.0
libtpu: 0.0.40
codegen_flags: <defaults>
</compile_context>

<pallas_src>
import numpy as np
import jax
import jax.numpy as jnp
from jax import lax
from jax.experimental import pallas as pl
from jax.experimental.pallas import tpu as pltpu


# bf16 MXU operands (f32 accumulation). Set to jnp.float32 for bit-closer
# parity with the PyTorch float32 module.
WEIGHT_DTYPE = jnp.bfloat16


def _mm(a, b):
    return jnp.dot(a.astype(WEIGHT_DTYPE), b.astype(WEIGHT_DTYPE),
                   preferred_element_type=jnp.float32)


def _round_up(x, m):
    return (x + m - 1) // m * m


def _full(a):
    # Full-array block (no grid): always satisfies the (8,128)-or-full rule.
    return pl.BlockSpec(a.shape, lambda: (0,) * a.ndim)


# ----------------------------------------------------------------------------
# Kernel 1: features @ W_resize + b -> BatchNorm1d (training-mode batch stats,
# biased variance, eps=1e-5) -> affine -> fused RNN input projection for t=0:
#           (bn_out @ W_ih^T + (b_ih + b_hh))
# ----------------------------------------------------------------------------
def resize_bn_proj_kernel(x_ref, wr_ref, br_ref, g_ref, be_ref,
                          wih_ref, brnn_ref, o_ref):
    y = _mm(x_ref[...], wr_ref[...]) + br_ref[...]
    mean = jnp.mean(y, axis=0, keepdims=True)
    var = jnp.mean((y - mean) ** 2, axis=0, keepdims=True)   # biased (BN train)
    y = (y - mean) * lax.rsqrt(var + 1e-5)
    y = y * g_ref[...] + be_ref[...]
    o_ref[...] = _mm(y, wih_ref[...]) + brnn_ref[...]


def resize_bn_proj(features, w_resize, b_resize, gamma, beta, wih_t, b_rnn):
    B = features.shape[0]
    H = wih_t.shape[1]
    # TODO(synk): at realistic B (>=128) add a "parallel" grid over row blocks
    # so the (B,2048) feature DMA pipelines against the K=2048 contraction.
    return pl.pallas_call(
        resize_bn_proj_kernel,
        out_shape=jax.ShapeDtypeStruct((B, H), jnp.float32),
        in_specs=[_full(features), _full(w_resize), _full(b_resize),
                  _full(gamma), _full(beta), _full(wih_t), _full(b_rnn)],
        out_specs=pl.BlockSpec((B, H), lambda: (0, 0)),
        compiler_params=pltpu.CompilerParams(
            vmem_limit_bytes=32 * 1024 * 1024),
    )(features, w_resize, b_resize, gamma, beta, wih_t, b_rnn)


# ----------------------------------------------------------------------------
# Kernel 2: FUSED embedding gather + RNN input projection.
#   ids (SMEM, scalar prefetch) -> gather G table rows per grid step with G
#   outstanding DMAs from the HBM-resident table into VMEM scratch -> one
#   (G,E)@(E,H) matmul + bias.
# ----------------------------------------------------------------------------
def embed_proj_kernel(ids_ref, table_hbm, wih_ref, brnn_ref, o_ref,
                      ebuf, sems):
    G = ebuf.shape[0]
    base = pl.program_id(0) * G
    # Issue all G row-gather DMAs (kept in flight concurrently), then wait.
    for g in range(G):
        pltpu.make_async_copy(table_hbm.at[ids_ref[base + g]],
                              ebuf.at[g], sems.at[g]).start()
    for g in range(G):
        pltpu.make_async_copy(table_hbm.at[0], ebuf.at[g], sems.at[g]).wait()
    o_ref[...] = _mm(ebuf[...], wih_ref[...]) + brnn_ref[...]


def embed_proj(ids_flat, table, wih_t, b_rnn, *, rows_per_block=16):
    N = ids_flat.shape[0]
    V, E = table.shape
    H = wih_t.shape[1]
    G = rows_per_block
    N_pad = _round_up(N, G)
    ids_p = jnp.pad(ids_flat.astype(jnp.int32), (0, N_pad - N))
    out = pl.pallas_call(
        embed_proj_kernel,
        out_shape=jax.ShapeDtypeStruct((N_pad, H), jnp.float32),
        grid_spec=pltpu.PrefetchScalarGridSpec(
            num_scalar_prefetch=1,
            grid=(N_pad // G,),
            in_specs=[pl.BlockSpec(memory_space=pl.ANY),            # table HBM
                      pl.BlockSpec((E, H), lambda i, ids: (0, 0)),  # W_ih^T
                      pl.BlockSpec((1, H), lambda i, ids: (0, 0))], # bias
            out_specs=pl.BlockSpec((G, H), lambda i, ids: (i, 0)),
            scratch_shapes=[pltpu.VMEM((G, E), table.dtype),
                            pltpu.SemaphoreType.DMA((G,))]),
        compiler_params=pltpu.CompilerParams(
            dimension_semantics=("parallel",),
            vmem_limit_bytes=32 * 1024 * 1024),
    )(ids_p, table, wih_t, b_rnn)
    return out[:N]


# ----------------------------------------------------------------------------
# Kernel 3: single-layer Elman RNN (tanh), whole time loop in ONE pallas_call.
# Inputs are the already-projected x_t (bias included), so each serial step is
# only  h_t = tanh(xproj_t + h_{t-1} @ W_hh^T).
# Optional batch-block grid axis ("parallel") for v7x megacore.
# ----------------------------------------------------------------------------
def rnn_kernel(x0_ref, x_ref, whh_ref, o_ref):
    T = x_ref.shape[0]
    h0 = jnp.tanh(x0_ref[...])          # h_{-1} = 0
    o_ref[0] = h0

    def step(t, h):
        h_new = jnp.tanh(x_ref[t] + _mm(h, whh_ref[...]))
        o_ref[t + 1] = h_new
        return h_new

    # Capped unroll: keeps LLO scheduling visibility without blowing the
    # 64-vreg budget at realistic T.
    lax.fori_loop(0, T, step, h0, unroll=4)


def rnn_forward(xproj0, xproj_rest, whh_t, *, batch_blocks=1):
    B, H = xproj0.shape
    T = xproj_rest.shape[0]
    if B % batch_blocks != 0:
        batch_blocks = 1
    bt = B // batch_blocks
    return pl.pallas_call(
        rnn_kernel,
        out_shape=jax.ShapeDtypeStruct((T + 1, B, H), jnp.float32),
        grid=(batch_blocks,),
        in_specs=[pl.BlockSpec((bt, H), lambda i: (i, 0)),
                  pl.BlockSpec((T, bt, H), lambda i: (0, i, 0)),
                  pl.BlockSpec((H, H), lambda i: (0, 0))],
        out_specs=pl.BlockSpec((T + 1, bt, H), lambda i: (0, i, 0)),
        compiler_params=pltpu.CompilerParams(
            dimension_semantics=("parallel",)),
    )(xproj0, xproj_rest, whh_t)


# ----------------------------------------------------------------------------
# Kernel 4: FUSED packed-row gather + output projection, tiled (rows x vocab).
#   Packed row indices (scalar prefetch, SMEM) select rows of the flattened
#   (T+1)*B x H hidden slab (HBM, pl.ANY) via manual DMA once per row tile
#   (re-used across all vocab tiles); vocab dim padded to a multiple of tv.
# ----------------------------------------------------------------------------
def packed_linear_kernel(rows_ref, h_hbm, w_ref, b_ref, o_ref, hbuf, sems):
    tn = hbuf.shape[0]
    i = pl.program_id(0)

    @pl.when(pl.program_id(1) == 0)       # gather rows once per row tile
    def _():
        base = i * tn
        for r in range(tn):
            pltpu.make_async_copy(h_hbm.at[rows_ref[base + r]],
                                  hbuf.at[r], sems.at[r]).start()
        for r in range(tn):
            pltpu.make_async_copy(h_hbm.at[0], hbuf.at[r], sems.at[r]).wait()

    o_ref[...] = _mm(hbuf[...], w_ref[...]) + b_ref[...]


def packed_linear(hiddens_flat, rows, w_out_t, b_out, *, tn=32, tv=512):
    R, H = hiddens_flat.shape
    V = w_out_t.shape[1]
    tv = min(tv, _round_up(V, 128))          # lane-dense 128-aligned tile
    V_pad = _round_up(V, tv)
    Nv = rows.shape[0]
    Nv_pad = _round_up(Nv, tn)               # bucketed row count
    rows_p = jnp.pad(rows.astype(jnp.int32), (0, Nv_pad - Nv))
    w_p = jnp.pad(w_out_t, ((0, 0), (0, V_pad - V)))
    b_p = jnp.pad(b_out, ((0, 0), (0, V_pad - V)))

    out = pl.pallas_call(
        packed_linear_kernel,
        out_shape=jax.ShapeDtypeStruct((Nv_pad, V_pad), jnp.float32),
        grid_spec=pltpu.PrefetchScalarGridSpec(
            num_scalar_prefetch=1,
            grid=(Nv_pad // tn, V_pad // tv),
            in_specs=[pl.BlockSpec(memory_space=pl.ANY),               # hiddens
                      pl.BlockSpec((H, tv), lambda i, j, rows: (0, j)),
                      pl.BlockSpec((1, tv), lambda i, j, rows: (0, j))],
            out_specs=pl.BlockSpec((tn, tv), lambda i, j, rows: (i, j)),
            scratch_shapes=[pltpu.VMEM((tn, H), hiddens_flat.dtype),
                            pltpu.SemaphoreType.DMA((tn,))]),
        compiler_params=pltpu.CompilerParams(
            # Row axis "parallel" (v7x megacore); vocab axis "arbitrary" so the
            # gathered row tile stays resident across all vocab tiles per core.
            dimension_semantics=("parallel", "arbitrary"),
            vmem_limit_bytes=48 * 1024 * 1024),
    )(rows_p, hiddens_flat, w_p, b_p)
    return out[:Nv, :V]


# ----------------------------------------------------------------------------
# pack_padded_sequence(enforce_sorted=False) row ordering (host-side indices).
# NOTE: `lengths` must count the prepended image-feature timestep, i.e.
#       max(lengths) == captions.shape[1] + 1 (same as the PyTorch call).
# ----------------------------------------------------------------------------
def pack_indices(lengths):
    lengths_np = np.asarray(lengths)
    sorted_idx = np.argsort(-lengths_np, kind="stable")
    time_idx, batch_idx = [], []
    for t in range(int(lengths_np.max())):
        for b in sorted_idx:
            if lengths_np[b] > t:
                time_idx.append(t)
                batch_idx.append(int(b))
    return (jnp.array(time_idx, dtype=jnp.int32),
            jnp.array(batch_idx, dtype=jnp.int32))


# ----------------------------------------------------------------------------
# Full forward pass.
# ----------------------------------------------------------------------------
def decoder_rnn_forward(params, features, captions, lengths):
    B, T = captions.shape
    H = params["whh_t"].shape[0]
    assert int(np.max(np.asarray(lengths))) <= T + 1, \
        "lengths must include the prepended image-feature timestep"

    # timestep-0 RNN input: resize Linear -> BN(train) -> @W_ih^T + b (fused)
    xproj0 = resize_bn_proj(features, params["w_resize"], params["b_resize"],
                            params["bn_gamma"], params["bn_beta"],
                            params["wih_t"], params["b_rnn"])          # (B,H)

    # fused embedding gather + input projection, emitted in time-major order
    # so it reshapes straight into the (T,B,H) slab (no concat / transpose)
    ids_tm = jnp.transpose(captions, (1, 0)).reshape(-1)               # (T*B,)
    xproj_rest = embed_proj(ids_tm, params["embed_table"],
                            params["wih_t"], params["b_rnn"])          # (T*B,H)
    xproj_rest = xproj_rest.reshape(T, B, H)

    # whole RNN time loop in one kernel; only h@W_hh + tanh per serial step
    hiddens = rnn_forward(xproj0, xproj_rest, params["whh_t"])     # (T+1,B,H)

    # packed-row selection fused into the vocab projection (row gather by DMA)
    time_idx, batch_idx = pack_indices(lengths)
    flat_rows = time_idx * B + batch_idx                           # into (T+1)*B
    h_flat = hiddens.reshape((T + 1) * B, H)
    return packed_linear(h_flat, flat_rows,
                         params["w_out_t"], params["b_out"])       # (Nv,V)


# ----------------------------------------------------------------------------
# Deterministic parameter init + example run.
# ----------------------------------------------------------------------------
def make_params(key, feat_dim, vocab_size, embed_size, hidden_size):
    ks = jax.random.split(key, 10)
    s = 0.05
    wd = WEIGHT_DTYPE
    return {
        # heavy matmul weights stored in bf16 (f32 accumulation in-kernel)
        "w_resize":    (s * jax.random.normal(ks[0], (feat_dim, embed_size), jnp.float32)).astype(wd),
        "b_resize":    s * jax.random.normal(ks[1], (1, embed_size), jnp.float32),
        "bn_gamma":    1.0 + s * jax.random.normal(ks[2], (1, embed_size), jnp.float32),
        "bn_beta":     s * jax.random.normal(ks[3], (1, embed_size), jnp.float32),
        # embedding table stays f32 (row-gather DMA source; traffic is tiny)
        "embed_table": s * jax.random.normal(ks[4], (vocab_size, embed_size), jnp.float32),
        "wih_t":       (s * jax.random.normal(ks[5], (embed_size, hidden_size), jnp.float32)).astype(wd),
        "whh_t":       (s * jax.random.normal(ks[6], (hidden_size, hidden_size), jnp.float32)).astype(wd),
        "b_rnn":       s * jax.random.normal(ks[7], (1, hidden_size), jnp.float32),  # b_ih + b_hh
        "w_out_t":     (s * jax.random.normal(ks[8], (hidden_size, vocab_size), jnp.float32)).astype(wd),
        "b_out":       s * jax.random.normal(ks[9], (1, vocab_size), jnp.float32),
    }


if __name__ == "__main__":
    # Small shapes consistent with the module: feature dim stays 2048
    # (hardcoded nn.Linear(2048, embed_size)); everything else shrunk.
    B, T = 4, 7                # captions: (B, T); RNN sequence length = T+1
    FEAT = 2048
    EMBED = 128
    HIDDEN = 128
    VOCAB = 256

    key = jax.random.PRNGKey(0)
    k_feat, k_cap, k_par = jax.random.split(key, 3)

    features = jax.random.normal(k_feat, (B, FEAT), jnp.float32)
    captions = jax.random.randint(k_cap, (B, T), 0, VOCAB, dtype=jnp.int32)
    lengths = [8, 6, 5, 3]     # lengths of the (image feature + caption) seqs

    params = make_params(k_par, FEAT, VOCAB, EMBED, HIDDEN)

    outputs = decoder_rnn_forward(params, features, captions, lengths)
    outputs = jax.block_until_ready(outputs)

    expected_rows = int(sum(lengths))
    assert outputs.shape == (expected_rows, VOCAB), outputs.shape
    assert bool(jnp.all(jnp.isfinite(outputs)))
    print("KERNEL_OK")
</pallas_src>

<mosaic_0001>
module attributes {stable_mosaic.version = 11 : i64} {
  func.func @resize_bn_proj_kernel(%arg0: memref<4x2048xf32, #tpu.memory_space<vmem>>, %arg1: memref<2048x128xbf16, #tpu.memory_space<vmem>>, %arg2: memref<1x128xf32, #tpu.memory_space<vmem>>, %arg3: memref<1x128xf32, #tpu.memory_space<vmem>>, %arg4: memref<1x128xf32, #tpu.memory_space<vmem>>, %arg5: memref<128x128xbf16, #tpu.memory_space<vmem>>, %arg6: memref<1x128xf32, #tpu.memory_space<vmem>>, %arg7: memref<4x128xf32, #tpu.memory_space<vmem>>) attributes {dimension_semantics = [], scalar_prefetch = 0 : i64, scratch_operands = 0 : i64, tpu.core_type = #tpu.core_type<tc>} {
    %c0 = arith.constant 0 : index
    %c0_0 = arith.constant 0 : index
    %0 = vector.load %arg0[%c0, %c0_0] : memref<4x2048xf32, #tpu.memory_space<vmem>>, vector<4x2048xf32>
    %c0_1 = arith.constant 0 : index
    %c0_2 = arith.constant 0 : index
    %1 = vector.load %arg1[%c0_1, %c0_2] : memref<2048x128xbf16, #tpu.memory_space<vmem>>, vector<2048x128xbf16>
    %2 = arith.truncf %0 : vector<4x2048xf32> to vector<4x2048xbf16>
    %cst = arith.constant dense<0.000000e+00> : vector<4x128xf32>
    %3 = tpu.matmul %2, %1, %cst {dimension_numbers = #tpu.dot_dimension_numbers<[1], [0], [0], [1], [0, 0, 1, 1], [], []>} : vector<4x2048xbf16>, vector<2048x128xbf16>, vector<4x128xf32> -> vector<4x128xf32>
    %c0_3 = arith.constant 0 : index
    %c0_4 = arith.constant 0 : index
    %4 = vector.load %arg2[%c0_3, %c0_4] : memref<1x128xf32, #tpu.memory_space<vmem>>, vector<1x128xf32>
    %5 = vector.broadcast %4 : vector<1x128xf32> to vector<4x128xf32>
    %6 = arith.addf %3, %5 : vector<4x128xf32>
    %cst_5 = arith.constant dense<0.000000e+00> : vector<128xf32>
    %7 = vector.multi_reduction <add>, %6, %cst_5 [0] : vector<4x128xf32> to vector<128xf32>
    %8 = vector.shape_cast %7 : vector<128xf32> to vector<1x128xf32>
    %cst_6 = arith.constant 4.000000e+00 : f32
    %9 = vector.broadcast %cst_6 : f32 to vector<1x128xf32>
    %10 = arith.divf %8, %9 : vector<1x128xf32>
    %11 = vector.broadcast %10 : vector<1x128xf32> to vector<4x128xf32>
    %12 = arith.subf %6, %11 : vector<4x128xf32>
    %13 = arith.mulf %12, %12 : vector<4x128xf32>
    %cst_7 = arith.constant dense<0.000000e+00> : vector<128xf32>
    %14 = vector.multi_reduction <add>, %13, %cst_7 [0] : vector<4x128xf32> to vector<128xf32>
    %15 = vector.shape_cast %14 : vector<128xf32> to vector<1x128xf32>
    %cst_8 = arith.constant 4.000000e+00 : f32
    %16 = vector.broadcast %cst_8 : f32 to vector<1x128xf32>
    %17 = arith.divf %15, %16 : vector<1x128xf32>
    %18 = vector.broadcast %10 : vector<1x128xf32> to vector<4x128xf32>
    %19 = arith.subf %6, %18 : vector<4x128xf32>
    %cst_9 = arith.constant 9.99999974E-6 : f32
    %20 = vector.broadcast %cst_9 : f32 to vector<1x128xf32>
    %21 = arith.addf %17, %20 : vector<1x128xf32>
    %22 = math.rsqrt %21 : vector<1x128xf32>
    %23 = vector.broadcast %22 : vector<1x128xf32> to vector<4x128xf32>
    %24 = arith.mulf %19, %23 : vector<4x128xf32>
    %c0_10 = arith.constant 0 : index
    %c0_11 = arith.constant 0 : index
    %25 = vector.load %arg3[%c0_10, %c0_11] : memref<1x128xf32, #tpu.memory_space<vmem>>, vector<1x128xf32>
    %26 = vector.broadcast %25 : vector<1x128xf32> to vector<4x128xf32>
    %27 = arith.mulf %24, %26 : vector<4x128xf32>
    %c0_12 = arith.constant 0 : index
    %c0_13 = arith.constant 0 : index
    %28 = vector.load %arg4[%c0_12, %c0_13] : memref<1x128xf32, #tpu.memory_space<vmem>>, vector<1x128xf32>
    %29 = vector.broadcast %28 : vector<1x128xf32> to vector<4x128xf32>
    %30 = arith.addf %27, %29 : vector<4x128xf32>
    %c0_14 = arith.constant 0 : index
    %c0_15 = arith.constant 0 : index
    %31 = vector.load %arg5[%c0_14, %c0_15] : memref<128x128xbf16, #tpu.memory_space<vmem>>, vector<128x128xbf16>
    %32 = arith.truncf %30 : vector<4x128xf32> to vector<4x128xbf16>
    %cst_16 = arith.constant dense<0.000000e+00> : vector<4x128xf32>
    %33 = tpu.matmul %32, %31, %cst_16 {dimension_numbers = #tpu.dot_dimension_numbers<[1], [0], [0], [1], [0, 0, 1, 1], [], []>} : vector<4x128xbf16>, vector<128x128xbf16>, vector<4x128xf32> -> vector<4x128xf32>
    %c0_17 = arith.constant 0 : index
    %c0_18 = arith.constant 0 : index
    %34 = vector.load %arg6[%c0_17, %c0_18] : memref<1x128xf32, #tpu.memory_space<vmem>>, vector<1x128xf32>
    %35 = vector.broadcast %34 : vector<1x128xf32> to vector<4x128xf32>
    %36 = arith.addf %33, %35 : vector<4x128xf32>
    %c0_19 = arith.constant 0 : index
    %c0_20 = arith.constant 0 : index
    %37 = vector.load %arg7[%c0_19, %c0_20] : memref<4x128xf32, #tpu.memory_space<vmem>>, vector<4x128xf32>
    tpu.vector_store %arg7[%c0_19, %c0_20], %36 {strides = array<i32>} : memref<4x128xf32, #tpu.memory_space<vmem>>, vector<4x128xf32>,
    return
  }
}

</mosaic_0001>

<llo_original>
// kernel: tpu_custom_call.1
$region0: #{tpu_custom_call.1}
  #allocation0 [shape = 'u32[]', space=smem, size = 0x4, offset = 0x4, fixed_abs, tag = 'smem constant byte address 0x4 - core index']
  #allocation1 [shape = 'u32[144,128]{1,0:T(1,128)}', space=vmem, size = 0x12000, scoped, tag = 'internal scratch']
  %s0 = inlined_call_operand.hbm [shape: f32[4,2048], index: 0, kind: input, shape index: {}]
  %s1 = inlined_call_operand.hbm [shape: bf16[2048,128], index: 1, kind: input, shape index: {}]
  %s2 = inlined_call_operand.vmem [shape: f32[1,128], index: 2, kind: input, shape index: {}]
  %s3 = inlined_call_operand.vmem [shape: f32[1,128], index: 3, kind: input, shape index: {}]
  %s4 = inlined_call_operand.vmem [shape: f32[1,128], index: 4, kind: input, shape index: {}]
  %s5 = inlined_call_operand.hbm [shape: bf16[128,128], index: 5, kind: input, shape index: {}]
  %s6 = inlined_call_operand.vmem [shape: f32[1,128], index: 6, kind: input, shape index: {}]
  %s7 = inlined_call_operand.hbm [shape: f32[4,128], index: 7, kind: output, shape index: {}]
  %s8 = sld [smem:[#allocation0]]
  $region50: #{tpu_custom_call.1} parent=0
    _
  %s10 = ssub.s32 1, %s8
  %s11 = scalar_select 0, %s10, %s8
  $region1: #{tpu_custom_call.1} parent=0
    #allocation2 [shape = 'u8[32768]{0}', space=vmem, size = 0x8000, scoped, tag = 'input window, operand 0, single buffered']
    #allocation3 [shape = 's32[1]{0}', space=sflag, size = 0x4, scoped, tag = 'scoped memory for tpu_custom_call.1']
    #allocation4 [shape = 's32[1]{0}', space=sflag, size = 0x4, scoped, tag = 'scoped memory for tpu_custom_call.1']
    #allocation5 [shape = 'u8[524288]{0}', space=vmem, size = 0x80000, scoped, tag = 'input window, operand 1, single buffered']
    #allocation6 [shape = 's32[1]{0}', space=sflag, size = 0x4, scoped, tag = 'scoped memory for tpu_custom_call.1']
    #allocation7 [shape = 'u8[32768]{0}', space=vmem, size = 0x8000, scoped, tag = 'input window, operand 5, single buffered']
    #allocation8 [shape = 'u8[2048]{0}', space=vmem, size = 0x800, scoped, tag = 'output window, operand 0, single buffered']
    %12 = vsyncpa [#allocation3], 0
    %13 = vsyncpa [#allocation6], 0
    %14 = vsyncpa [#allocation4], 0
    // Predicated region
    $region2: #{tpu_custom_call.1} parent=1 // pred_check
      _
    $region3: #{tpu_custom_call.1} parent=1 // pred_check_branch
      %16 = sbr.rel (0) target = $region5
    $region4: #{tpu_custom_call.1} parent=1 // pred_region
      %s18 = ssub.s32 1024, 1024
      %19 = vsyncadd [#allocation3], %s18
      %s21 = sshll.u32 [#allocation2], 4
      %s22 = int_to_ptr.vmem [resolvable:$true] %s21
      %24 = dma.hbm_to_vmem [thread:$0]  %s0, 1024, %s22, [#allocation3]
    $region5: #{tpu_custom_call.1} parent=1 // pred_fallthru
      _
    // Predicated region
    $region6: #{tpu_custom_call.1} parent=1 // pred_check
      _
    $region7: #{tpu_custom_call.1} parent=1 // pred_check_branch
      %26 = sbr.rel (0) target = $region9
    $region8: #{tpu_custom_call.1} parent=1 // pred_region
      %s28 = ssub.s32 16384, 16384
      %29 = vsyncadd [#allocation6], %s28
      %s30 = sshll.u32 [#allocation5], 4
      %s31 = int_to_ptr.vmem [resolvable:$true] %s30
      %36 = dma.hbm_to_vmem [thread:$0]  %s1, 16384, %s31, [#allocation6], 64, 64, 4
    $region9: #{tpu_custom_call.1} parent=1 // pred_fallthru
      _
    // Predicated region
    $region10: #{tpu_custom_call.1} parent=1 // pred_check
      _
    $region11: #{tpu_custom_call.1} parent=1 // pred_check_branch
      %38 = sbr.rel (0) target = $region13
    $region12: #{tpu_custom_call.1} parent=1 // pred_region
      _
    $region13: #{tpu_custom_call.1} parent=1 // pred_fallthru
      _
    // Predicated region
    $region14: #{tpu_custom_call.1} parent=1 // pred_check
      _
    $region15: #{tpu_custom_call.1} parent=1 // pred_check_branch
      %40 = sbr.rel (0) target = $region17
    $region16: #{tpu_custom_call.1} parent=1 // pred_region
      _
    $region17: #{tpu_custom_call.1} parent=1 // pred_fallthru
      _
    // Predicated region
    $region18: #{tpu_custom_call.1} parent=1 // pred_check
      _
    $region19: #{tpu_custom_call.1} parent=1 // pred_check_branch
      %42 = sbr.rel (0) target = $region21
    $region20: #{tpu_custom_call.1} parent=1 // pred_region
      _
    $region21: #{tpu_custom_call.1} parent=1 // pred_fallthru
      _
    // Predicated region
    $region22: #{tpu_custom_call.1} parent=1 // pred_check
      _
    $region23: #{tpu_custom_call.1} parent=1 // pred_check_branch
      %44 = sbr.rel (0) target = $region25
    $region24: #{tpu_custom_call.1} parent=1 // pred_region
      %s46 = ssub.s32 1024, 1024
      %47 = vsyncadd [#allocation6], %s46
      %s48 = sshll.u32 [#allocation7], 4
      %s49 = int_to_ptr.vmem [resolvable:$true] %s48
      %54 = dma.hbm_to_vmem [thread:$0]  %s5, 1024, %s49, [#allocation6], 64, 64, 4
    $region25: #{tpu_custom_call.1} parent=1 // pred_fallthru
      _
    // Predicated region
    $region26: #{tpu_custom_call.1} parent=1 // pred_check
      _
    $region27: #{tpu_custom_call.1} parent=1 // pred_check_branch
      %56 = sbr.rel (0) target = $region29
    $region28: #{tpu_custom_call.1} parent=1 // pred_region
      _
    $region29: #{tpu_custom_call.1} parent=1 // pred_fallthru
      _
    // Predicated region
    $region30: #{tpu_custom_call.1} parent=1 // pred_check
      _
    $region31: #{tpu_custom_call.1} parent=1 // pred_check_branch
      %58 = sbr.rel (0) target = $region33
    $region32: #{tpu_custom_call.1} parent=1 // pred_region
      %59 = dma.done [#allocation3], 1024
    $region33: #{tpu_custom_call.1} parent=1 // pred_fallthru
      _
    // Predicated region
    $region34: #{tpu_custom_call.1} parent=1 // pred_check
      _
    $region35: #{tpu_custom_call.1} parent=1 // pred_check_branch
      %61 = sbr.rel (0) target = $region37
    $region36: #{tpu_custom_call.1} parent=1 // pred_region
      %62 = dma.done [#allocation6], 16384
    $region37: #{tpu_custom_call.1} parent=1 // pred_fallthru
      _
    // Predicated region
    $region38: #{tpu_custom_call.1} parent=1 // pred_check
      _
    $region39: #{tpu_custom_call.1} parent=1 // pred_check_branch
      %64 = sbr.rel (0) target = $region41
    $region40: #{tpu_custom_call.1} parent=1 // pred_region
      %65 = dma.done [#allocation6], 1024
    $region41: #{tpu_custom_call.1} parent=1 // pred_fallthru
      _
    %v67 = vld [vmem:[#allocation2] sm:$0xff]
    %v68 = vld [vmem:[#allocation2 + $0x8] sm:$0xff]
    %v69 = vld [vmem:[#allocation2 + $0x10] sm:$0xff]
    %v70 = vld [vmem:[#allocation2 + $0x18] sm:$0xff]
    %v71 = vld [vmem:[#allocation2 + $0x20] sm:$0xff]
    %v72 = vld [vmem:[#allocation2 + $0x28] sm:$0xff]
    %v73 = vld [vmem:[#allocation2 + $0x30] sm:$0xff]
    %v74 = vld [vmem:[#allocation2 + $0x38] sm:$0xff]
    %v75 = vld [vmem:[#allocation5] sm:$0xf]
    %v76 = vld [vmem:[#allocation5 + $0x4] sm:$0xf]
    %v77 = vld [vmem:[#allocation5 + $0x8] sm:$0xf]
    %v78 = vld [vmem:[#allocation5 + $0xc] sm:$0xf]
    %v79 = vld [vmem:[#allocation5 + $0x10] sm:$0xf]
    %v80 = vld [vmem:[#allocation5 + $0x14] sm:$0xf]
    %v81 = vld [vmem:[#allocation5 + $0x18] sm:$0xf]
    %v82 = vld [vmem:[#allocation5 + $0x1c] sm:$0xf]
    %v83 = vld [vmem:[#allocation5 + $0x20] sm:$0xf]
    %v84 = vld [vmem:[#allocation5 + $0x24] sm:$0xf]
    %v85 = vld [vmem:[#allocation5 + $0x28] sm:$0xf]
    %v86 = vld [vmem:[#allocation5 + $0x2c] sm:$0xf]
    %v87 = vld [vmem:[#allocation5 + $0x30] sm:$0xf]
    %v88 = vld [vmem:[#allocation5 + $0x34] sm:$0xf]
    %v89 = vld [vmem:[#allocation5 + $0x38] sm:$0xf]
    %v90 = vld [vmem:[#allocation5 + $0x3c] sm:$0xf]
    %v91 = vld [vmem:[#allocation5 + $0x40] sm:$0xf]
    %v92 = vld [vmem:[#allocation5 + $0x44] sm:$0xf]
    %v93 = vld [vmem:[#allocation5 + $0x48] sm:$0xf]
    %v94 = vld [vmem:[#allocation5 + $0x4c] sm:$0xf]
    %v95 = vld [vmem:[#allocation5 + $0x50] sm:$0xf]
    %v96 = vld [vmem:[#allocation5 + $0x54] sm:$0xf]
    %v97 = vld [vmem:[#allocation5 + $0x58] sm:$0xf]
    %v98 = vld [vmem:[#allocation5 + $0x5c] sm:$0xf]
    %v99 = vld [vmem:[#allocation5 + $0x60] sm:$0xf]
    %v100 = vld [vmem:[#allocation5 + $0x64] sm:$0xf]
    %v101 = vld [vmem:[#allocation5 + $0x68] sm:$0xf]
    %v102 = vld [vmem:[#allocation5 + $0x6c] sm:$0xf]
    %v103 = vld [vmem:[#allocation5 + $0x70] sm:$0xf]
    %v104 = vld [vmem:[#allocation5 + $0x74] sm:$0xf]
    %v105 = vld [vmem:[#allocation5 + $0x78] sm:$0xf]
    %v106 = vld [vmem:[#allocation5 + $0x7c] sm:$0xf]
    %v107 = vld [vmem:[#allocation5 + $0x80] sm:$0xf]
    %v108 = vld [vmem:[#allocation5 + $0x84] sm:$0xf]
    %v109 = vld [vmem:[#allocation5 + $0x88] sm:$0xf]
    %v110 = vld [vmem:[#allocation5 + $0x8c] sm:$0xf]
    %v111 = vld [vmem:[#allocation5 + $0x90] sm:$0xf]
    %v112 = vld [vmem:[#allocation5 + $0x94] sm:$0xf]
    %v113 = vld [vmem:[#allocation5 + $0x98] sm:$0xf]
    %v114 = vld [vmem:[#allocation5 + $0x9c] sm:$0xf]
    %v115 = vld [vmem:[#allocation5 + $0xa0] sm:$0xf]
    %v116 = vld [vmem:[#allocation5 + $0xa4] sm:$0xf]
    %v117 = vld [vmem:[#allocation5 + $0xa8] sm:$0xf]
    %v118 = vld [vmem:[#allocation5 + $0xac] sm:$0xf]
    %v119 = vld [vmem:[#allocation5 + $0xb0] sm:$0xf]
    %v120 = vld [vmem:[#allocation5 + $0xb4] sm:$0xf]
    %v121 = vld [vmem:[#allocation5 + $0xb8] sm:$0xf]
    %v122 = vld [vmem:[#allocation5 + $0xbc] sm:$0xf]
    %v123 = vld [vmem:[#allocation5 + $0xc0] sm:$0xf]
    %v124 = vld [vmem:[#allocation5 + $0xc4] sm:$0xf]
    %v125 = vld [vmem:[#allocation5 + $0xc8] sm:$0xf]
    %v126 = vld [vmem:[#allocation5 + $0xcc] sm:$0xf]
    %v127 = vld [vmem:[#allocation5 + $0xd0] sm:$0xf]
    %v128 = vld [vmem:[#allocation5 + $0xd4] sm:$0xf]
    %v129 = vld [vmem:[#allocation5 + $0xd8] sm:$0xf]
    %v130 = vld [vmem:[#allocation5 + $0xdc] sm:$0xf]
    %v131 = vld [vmem:[#allocation5 + $0xe0] sm:$0xf]
    %v132 = vld [vmem:[#allocation5 + $0xe4] sm:$0xf]
    %v133 = vld [vmem:[#allocation5 + $0xe8] sm:$0xf]
    %v134 = vld [vmem:[#allocation5 + $0xec] sm:$0xf]
    %v135 = vld [vmem:[#allocation5 + $0xf0] sm:$0xf]
    %v136 = vld [vmem:[#allocation5 + $0xf4] sm:$0xf]
    %v137 = vld [vmem:[#allocation5 + $0xf8] sm:$0xf]
    %v138 = vld [vmem:[#allocation5 + $0xfc] sm:$0xf]
    %v139 = vld [vmem:[#allocation5 + $0x100] sm:$0xf]
    %v140 = vld [vmem:[#allocation5 + $0x104] sm:$0xf]
    %v141 = vld [vmem:[#allocation5 + $0x108] sm:$0xf]
    %v142 = vld [vmem:[#allocation5 + $0x10c] sm:$0xf]
    %v143 = vld [vmem:[#allocation5 + $0x110] sm:$0xf]
    %v144 = vld [vmem:[#allocation5 + $0x114] sm:$0xf]
    %v145 = vld [vmem:[#allocation5 + $0x118] sm:$0xf]
    %v146 = vld [vmem:[#allocation5 + $0x11c] sm:$0xf]
    %v147 = vld [vmem:[#allocation5 + $0x120] sm:$0xf]
    %v148 = vld [vmem:[#allocation5 + $0x124] sm:$0xf]
    %v149 = vld [vmem:[#allocation5 + $0x128] sm:$0xf]
    %v150 = vld [vmem:[#allocation5 + $0x12c] sm:$0xf]
    %v151 = vld [vmem:[#allocation5 + $0x130] sm:$0xf]
    %v152 = vld [vmem:[#allocation5 + $0x134] sm:$0xf]
    %v153 = vld [vmem:[#allocation5 + $0x138] sm:$0xf]
    %v154 = vld [vmem:[#allocation5 + $0x13c] sm:$0xf]
    %v155 = vld [vmem:[#allocation5 + $0x140] sm:$0xf]
    %v156 = vld [vmem:[#allocation5 + $0x144] sm:$0xf]
    %v157 = vld [vmem:[#allocation5 + $0x148] sm:$0xf]
    %v158 = vld [vmem:[#allocation5 + $0x14c] sm:$0xf]
    %v159 = vld [vmem:[#allocation5 + $0x150] sm:$0xf]
    %v160 = vld [vmem:[#allocation5 + $0x154] sm:$0xf]
    %v161 = vld [vmem:[#allocation5 + $0x158] sm:$0xf]
    %v162 = vld [vmem:[#allocation5 + $0x15c] sm:$0xf]
    %v163 = vld [vmem:[#allocation5 + $0x160] sm:$0xf]
    %v164 = vld [vmem:[#allocation5 + $0x164] sm:$0xf]
    %v165 = vld [vmem:[#allocation5 + $0x168] sm:$0xf]
    %v166 = vld [vmem:[#allocation5 + $0x16c] sm:$0xf]
    %v167 = vld [vmem:[#allocation5 + $0x170] sm:$0xf]
    %v168 = vld [vmem:[#allocation5 + $0x174] sm:$0xf]
    %v169 = vld [vmem:[#allocation5 + $0x178] sm:$0xf]
    %v170 = vld [vmem:[#allocation5 + $0x17c] sm:$0xf]
    %v171 = vld [vmem:[#allocation5 + $0x180] sm:$0xf]
    %v172 = vld [vmem:[#allocation5 + $0x184] sm:$0xf]
    %v173 = vld [vmem:[#allocation5 + $0x188] sm:$0xf]
    %v174 = vld [vmem:[#allocation5 + $0x18c] sm:$0xf]
    %v175 = vld [vmem:[#allocation5 + $0x190] sm:$0xf]
    %v176 = vld [vmem:[#allocation5 + $0x194] sm:$0xf]
    %v177 = vld [vmem:[#allocation5 + $0x198] sm:$0xf]
    %v178 = vld [vmem:[#allocation5 + $0x19c] sm:$0xf]
    %v179 = vld [vmem:[#allocation5 + $0x1a0] sm:$0xf]
    %v180 = vld [vmem:[#allocation5 + $0x1a4] sm:$0xf]
    %v181 = vld [vmem:[#allocation5 + $0x1a8] sm:$0xf]
    %v182 = vld [vmem:[#allocation5 + $0x1ac] sm:$0xf]
    %v183 = vld [vmem:[#allocation5 + $0x1b0] sm:$0xf]
    %v184 = vld [vmem:[#allocation5 + $0x1b4] sm:$0xf]
    %v185 = vld [vmem:[#allocation5 + $0x1b8] sm:$0xf]
    %v186 = vld [vmem:[#allocation5 + $0x1bc] sm:$0xf]
    %v187 = vld [vmem:[#allocation5 + $0x1c0] sm:$0xf]
    %v188 = vld [vmem:[#allocation5 + $0x1c4] sm:$0xf]
    %v189 = vld [vmem:[#allocation5 + $0x1c8] sm:$0xf]
    %v190 = vld [vmem:[#allocation5 + $0x1cc] sm:$0xf]
    %v191 = vld [vmem:[#allocation5 + $0x1d0] sm:$0xf]
    %v192 = vld [vmem:[#allocation5 + $0x1d4] sm:$0xf]
    %v193 = vld [vmem:[#allocation5 + $0x1d8] sm:$0xf]
    %v194 = vld [vmem:[#allocation5 + $0x1dc] sm:$0xf]
    %v195 = vld [vmem:[#allocation5 + $0x1e0] sm:$0xf]
    %v196 = vld [vmem:[#allocation5 + $0x1e4] sm:$0xf]
    %v197 = vld [vmem:[#allocation5 + $0x1e8] sm:$0xf]
    %v198 = vld [vmem:[#allocation5 + $0x1ec] sm:$0xf]
    %v199 = vld [vmem:[#allocation5 + $0x1f0] sm:$0xf]
    %v200 = vld [vmem:[#allocation5 + $0x1f4] sm:$0xf]
    %v201 = vld [vmem:[#allocation5 + $0x1f8] sm:$0xf]
    %v202 = vld [vmem:[#allocation5 + $0x1fc] sm:$0xf]
    %v203 = vld [vmem:[#allocation5 + $0x200] sm:$0xf]
    %v204 = vld [vmem:[#allocation5 + $0x204] sm:$0xf]
    %v205 = vld [vmem:[#allocation5 + $0x208] sm:$0xf]
    %v206 = vld [vmem:[#allocation5 + $0x20c] sm:$0xf]
    %v207 = vld [vmem:[#allocation5 + $0x210] sm:$0xf]
    %v208 = vld [vmem:[#allocation5 + $0x214] sm:$0xf]
    %v209 = vld [vmem:[#allocation5 + $0x218] sm:$0xf]
    %v210 = vld [vmem:[#allocation5 + $0x21c] sm:$0xf]
    %v211 = vld [vmem:[#allocation5 + $0x220] sm:$0xf]
    %v212 = vld [vmem:[#allocation5 + $0x224] sm:$0xf]
    %v213 = vld [vmem:[#allocation5 + $0x228] sm:$0xf]
    %v214 = vld [vmem:[#allocation5 + $0x22c] sm:$0xf]
    %v215 = vld [vmem:[#allocation5 + $0x230] sm:$0xf]
    %v216 = vld [vmem:[#allocation5 + $0x234] sm:$0xf]
    %v217 = vld [vmem:[#allocation5 + $0x238] sm:$0xf]
    %v218 = vld [vmem:[#allocation5 + $0x23c] sm:$0xf]
    %v219 = vld [vmem:[#allocation5 + $0x240] sm:$0xf]
    %v220 = vld [vmem:[#allocation5 + $0x244] sm:$0xf]
    %v221 = vld [vmem:[#allocation5 + $0x248] sm:$0xf]
    %v222 = vld [vmem:[#allocation5 + $0x24c] sm:$0xf]
    %v223 = vld [vmem:[#allocation5 + $0x250] sm:$0xf]
    %v224 = vld [vmem:[#allocation5 + $0x254] sm:$0xf]
    %v225 = vld [vmem:[#allocation5 + $0x258] sm:$0xf]
    %v226 = vld [vmem:[#allocation5 + $0x25c] sm:$0xf]
    %v227 = vld [vmem:[#allocation5 + $0x260] sm:$0xf]
    %v228 = vld [vmem:[#allocation5 + $0x264] sm:$0xf]
    %v229 = vld [vmem:[#allocation5 + $0x268] sm:$0xf]
    %v230 = vld [vmem:[#allocation5 + $0x26c] sm:$0xf]
    %v231 = vld [vmem:[#allocation5 + $0x270] sm:$0xf]
    %v232 = vld [vmem:[#allocation5 + $0x274] sm:$0xf]
    %v233 = vld [vmem:[#allocation5 + $0x278] sm:$0xf]
    %v234 = vld [vmem:[#allocation5 + $0x27c] sm:$0xf]
    %v235 = vld [vmem:[#allocation5 + $0x280] sm:$0xf]
    %v236 = vld [vmem:[#allocation5 + $0x284] sm:$0xf]
    %v237 = vld [vmem:[#allocation5 + $0x288] sm:$0xf]
    %v238 = vld [vmem:[#allocation5 + $0x28c] sm:$0xf]
    %v239 = vld [vmem:[#allocation5 + $0x290] sm:$0xf]
    %v240 = vld [vmem:[#allocation5 + $0x294] sm:$0xf]
    %v241 = vld [vmem:[#allocation5 + $0x298] sm:$0xf]
    %v242 = vld [vmem:[#allocation5 + $0x29c] sm:$0xf]
    %v243 = vld [vmem:[#allocation5 + $0x2a0] sm:$0xf]
    %v244 = vld [vmem:[#allocation5 + $0x2a4] sm:$0xf]
    %v245 = vld [vmem:[#allocation5 + $0x2a8] sm:$0xf]
    %v246 = vld [vmem:[#allocation5 + $0x2ac] sm:$0xf]
    %v247 = vld [vmem:[#allocation5 + $0x2b0] sm:$0xf]
    %v248 = vld [vmem:[#allocation5 + $0x2b4] sm:$0xf]
    %v249 = vld [vmem:[#allocation5 + $0x2b8] sm:$0xf]
    %v250 = vld [vmem:[#allocation5 + $0x2bc] sm:$0xf]
    %v251 = vld [vmem:[#allocation5 + $0x2c0] sm:$0xf]
    %v252 = vld [vmem:[#allocation5 + $0x2c4] sm:$0xf]
    %v253 = vld [vmem:[#allocation5 + $0x2c8] sm:$0xf]
    %v254 = vld [vmem:[#allocation5 + $0x2cc] sm:$0xf]
    %v255 = vld [vmem:[#allocation5 + $0x2d0] sm:$0xf]
    %v256 = vld [vmem:[#allocation5 + $0x2d4] sm:$0xf]
    %v257 = vld [vmem:[#allocation5 + $0x2d8] sm:$0xf]
    %v258 = vld [vmem:[#allocation5 + $0x2dc] sm:$0xf]
    %v259 = vld [vmem:[#allocation5 + $0x2e0] sm:$0xf]
    %v260 = vld [vmem:[#allocation5 + $0x2e4] sm:$0xf]
    %v261 = vld [vmem:[#allocation5 + $0x2e8] sm:$0xf]
    %v262 = vld [vmem:[#allocation5 + $0x2ec] sm:$0xf]
    %v263 = vld [vmem:[#allocation5 + $0x2f0] sm:$0xf]
    %v264 = vld [vmem:[#allocation5 + $0x2f4] sm:$0xf]
    %v265 = vld [vmem:[#allocation5 + $0x2f8] sm:$0xf]
    %v266 = vld [vmem:[#allocation5 + $0x2fc] sm:$0xf]
    %v267 = vld [vmem:[#allocation5 + $0x300] sm:$0xf]
    %v268 = vld [vmem:[#allocation5 + $0x304] sm:$0xf]
    %v269 = vld [vmem:[#allocation5 + $0x308] sm:$0xf]
    %v270 = vld [vmem:[#allocation5 + $0x30c] sm:$0xf]
    %v271 = vld [vmem:[#allocation5 + $0x310] sm:$0xf]
    %v272 = vld [vmem:[#allocation5 + $0x314] sm:$0xf]
    %v273 = vld [vmem:[#allocation5 + $0x318] sm:$0xf]
    %v274 = vld [vmem:[#allocation5 + $0x31c] sm:$0xf]
    %v275 = vld [vmem:[#allocation5 + $0x320] sm:$0xf]
    %v276 = vld [vmem:[#allocation5 + $0x324] sm:$0xf]
    %v277 = vld [vmem:[#allocation5 + $0x328] sm:$0xf]
    %v278 = vld [vmem:[#allocation5 + $0x32c] sm:$0xf]
    %v279 = vld [vmem:[#allocation5 + $0x330] sm:$0xf]
    %v280 = vld [vmem:[#allocation5 + $0x334] sm:$0xf]
    %v281 = vld [vmem:[#allocation5 + $0x338] sm:$0xf]
    %v282 = vld [vmem:[#allocation5 + $0x33c] sm:$0xf]
    %v283 = vld [vmem:[#allocation5 + $0x340] sm:$0xf]
    %v284 = vld [vmem:[#allocation5 + $0x344] sm:$0xf]
    %v285 = vld [vmem:[#allocation5 + $0x348] sm:$0xf]
    %v286 = vld [vmem:[#allocation5 + $0x34c] sm:$0xf]
    %v287 = vld [vmem:[#allocation5 + $0x350] sm:$0xf]
    %v288 = vld [vmem:[#allocation5 + $0x354] sm:$0xf]
    %v289 = vld [vmem:[#allocation5 + $0x358] sm:$0xf]
    %v290 = vld [vmem:[#allocation5 + $0x35c] sm:$0xf]
    %v291 = vld [vmem:[#allocation5 + $0x360] sm:$0xf]
    %v292 = vld [vmem:[#allocation5 + $0x364] sm:$0xf]
    %v293 = vld [vmem:[#allocation5 + $0x368] sm:$0xf]
    %v294 = vld [vmem:[#allocation5 + $0x36c] sm:$0xf]
    %v295 = vld [vmem:[#allocation5 + $0x370] sm:$0xf]
    %v296 = vld [vmem:[#allocation5 + $0x374] sm:$0xf]
    %v297 = vld [vmem:[#allocation5 + $0x378] sm:$0xf]
    %v298 = vld [vmem:[#allocation5 + $0x37c] sm:$0xf]
    %v299 = vld [vmem:[#allocation5 + $0x380] sm:$0xf]
    %v300 = vld [vmem:[#allocation5 + $0x384] sm:$0xf]
    %v301 = vld [vmem:[#allocation5 + $0x388] sm:$0xf]
    %v302 = vld [vmem:[#allocation5 + $0x38c] sm:$0xf]
    %v303 = vld [vmem:[#allocation5 + $0x390] sm:$0xf]
    %v304 = vld [vmem:[#allocation5 + $0x394] sm:$0xf]
    %v305 = vld [vmem:[#allocation5 + $0x398] sm:$0xf]
    %v306 = vld [vmem:[#allocation5 + $0x39c] sm:$0xf]
    %v307 = vld [vmem:[#allocation5 + $0x3a0] sm:$0xf]
    %v308 = vld [vmem:[#allocation5 + $0x3a4] sm:$0xf]
    %v309 = vld [vmem:[#allocation5 + $0x3a8] sm:$0xf]
    %v310 = vld [vmem:[#allocation5 + $0x3ac] sm:$0xf]
    %v311 = vld [vmem:[#allocation5 + $0x3b0] sm:$0xf]
    %v312 = vld [vmem:[#allocation5 + $0x3b4] sm:$0xf]
    %v313 = vld [vmem:[#allocation5 + $0x3b8] sm:$0xf]
    %v314 = vld [vmem:[#allocation5 + $0x3bc] sm:$0xf]
    %v315 = vld [vmem:[#allocation5 + $0x3c0] sm:$0xf]
    %v316 = vld [vmem:[#allocation5 + $0x3c4] sm:$0xf]
    %v317 = vld [vmem:[#allocation5 + $0x3c8] sm:$0xf]
    %v318 = vld [vmem:[#allocation5 + $0x3cc] sm:$0xf]
    %v319 = vld [vmem:[#allocation5 + $0x3d0] sm:$0xf]
    %v320 = vld [vmem:[#allocation5 + $0x3d4] sm:$0xf]
    %v321 = vld [vmem:[#allocation5 + $0x3d8] sm:$0xf]
    %v322 = vld [vmem:[#allocation5 + $0x3dc] sm:$0xf]
    %v323 = vld [vmem:[#allocation5 + $0x3e0] sm:$0xf]
    %v324 = vld [vmem:[#allocation5 + $0x3e4] sm:$0xf]
    %v325 = vld [vmem:[#allocation5 + $0x3e8] sm:$0xf]
    %v326 = vld [vmem:[#allocation5 + $0x3ec] sm:$0xf]
    %v327 = vld [vmem:[#allocation5 + $0x3f0] sm:$0xf]
    %v328 = vld [vmem:[#allocation5 + $0x3f4] sm:$0xf]
    %v329 = vld [vmem:[#allocation5 + $0x3f8] sm:$0xf]
    %v330 = vld [vmem:[#allocation5 + $0x3fc] sm:$0xf]
    %v339 = vcombine.high %v67, %v67
    %v340 = vcombine.high %v68, %v68
    %v341 = vcombine.high %v69, %v69
    %v342 = vcombine.high %v70, %v70
    %v343 = vcombine.high %v71, %v71
    %v344 = vcombine.high %v72, %v72
    %v345 = vcombine.high %v73, %v73
    %v346 = vcombine.high %v74, %v74
    %v355 = vpack.c.bf16 %v67, %v67
    %v356 = vpack.c.bf16 %v339, %v339
    %v357 = vpack.c.bf16 %v68, %v68
    %v358 = vpack.c.bf16 %v340, %v340
    %v359 = vpack.c.bf16 %v69, %v69
    %v360 = vpack.c.bf16 %v341, %v341
    %v361 = vpack.c.bf16 %v70, %v70
    %v362 = vpack.c.bf16 %v342, %v342
    %v363 = vpack.c.bf16 %v71, %v71
    %v364 = vpack.c.bf16 %v343, %v343
    %v365 = vpack.c.bf16 %v72, %v72
    %v366 = vpack.c.bf16 %v344, %v344
    %v367 = vpack.c.bf16 %v73, %v73
    %v368 = vpack.c.bf16 %v345, %v345
    %v369 = vpack.c.bf16 %v74, %v74
    %v370 = vpack.c.bf16 %v346, %v346
    %v371 = vld [vmem:[%s2] sm:$0x1]
    %v373 = vlaneseq
    %v374 = vshrl.u32 %v373, 7
    %v375 = vsub.s32 0, %v374
    %v376 = vrot.slane %v371, %v375
    %v634 = vunpack.c.l.b16 %v75
    %v635 = vunpack.c.l.b16 %v76
    %v636 = vunpack.c.l.b16 %v77
    %v637 = vunpack.c.l.b16 %v78
    %v638 = vunpack.c.l.b16 %v79
    %v639 = vunpack.c.l.b16 %v80
    %v640 = vunpack.c.l.b16 %v81
    %v641 = vunpack.c.l.b16 %v82
    %v642 = vunpack.c.l.b16 %v83
    %v643 = vunpack.c.l.b16 %v84
    %v644 = vunpack.c.l.b16 %v85
    %v645 = vunpack.c.l.b16 %v86
    %v646 = vunpack.c.l.b16 %v87
    %v647 = vunpack.c.l.b16 %v88
    %v648 = vunpack.c.l.b16 %v89
    %v649 = vunpack.c.l.b16 %v90
    %v650 = vunpack.c.l.b16 %v91
    %v651 = vunpack.c.l.b16 %v92
    %v652 = vunpack.c.l.b16 %v93
    %v653 = vunpack.c.l.b16 %v94
    %v654 = vunpack.c.l.b16 %v95
    %v655 = vunpack.c.l.b16 %v96
    %v656 = vunpack.c.l.b16 %v97
    %v657 = vunpack.c.l.b16 %v98
    %v658 = vunpack.c.l.b16 %v99
    %v659 = vunpack.c.l.b16 %v100
    %v660 = vunpack.c.l.b16 %v101
    %v661 = vunpack.c.l.b16 %v102
    %v662 = vunpack.c.l.b16 %v103
    %v663 = vunpack.c.l.b16 %v104
    %v664 = vunpack.c.l.b16 %v105
    %v665 = vunpack.c.l.b16 %v106
    %v666 = vunpack.c.l.b16 %v107
    %v667 = vunpack.c.l.b16 %v108
    %v668 = vunpack.c.l.b16 %v109
    %v669 = vunpack.c.l.b16 %v110
    %v670 = vunpack.c.l.b16 %v111
    %v671 = vunpack.c.l.b16 %v112
    %v672 = vunpack.c.l.b16 %v113
    %v673 = vunpack.c.l.b16 %v114
    %v674 = vunpack.c.l.b16 %v115
    %v675 = vunpack.c.l.b16 %v116
    %v676 = vunpack.c.l.b16 %v117
    %v677 = vunpack.c.l.b16 %v118
    %v678 = vunpack.c.l.b16 %v119
    %v679 = vunpack.c.l.b16 %v120
    %v680 = vunpack.c.l.b16 %v121
    %v681 = vunpack.c.l.b16 %v122
    %v682 = vunpack.c.l.b16 %v123
    %v683 = vunpack.c.l.b16 %v124
    %v684 = vunpack.c.l.b16 %v125
    %v685 = vunpack.c.l.b16 %v126
    %v686 = vunpack.c.l.b16 %v127
    %v687 = vunpack.c.l.b16 %v128
    %v688 = vunpack.c.l.b16 %v129
    %v689 = vunpack.c.l.b16 %v130
    %v690 = vunpack.c.l.b16 %v131
    %v691 = vunpack.c.l.b16 %v132
    %v692 = vunpack.c.l.b16 %v133
    %v693 = vunpack.c.l.b16 %v134
    %v694 = vunpack.c.l.b16 %v135
    %v695 = vunpack.c.l.b16 %v136
    %v696 = vunpack.c.l.b16 %v137
    %v697 = vunpack.c.l.b16 %v138
    %v698 = vunpack.c.l.b16 %v139
    %v699 = vunpack.c.l.b16 %v140
    %v700 = vunpack.c.l.b16 %v141
    %v701 = vunpack.c.l.b16 %v142
    %v702 = vunpack.c.l.b16 %v143
    %v703 = vunpack.c.l.b16 %v144
    %v704 = vunpack.c.l.b16 %v145
    %v705 = vunpack.c.l.b16 %v146
    %v706 = vunpack.c.l.b16 %v147
    %v707 = vunpack.c.l.b16 %v148
    %v708 = vunpack.c.l.b16 %v149
    %v709 = vunpack.c.l.b16 %v150
    %v710 = vunpack.c.l.b16 %v151
    %v711 = vunpack.c.l.b16 %v152
    %v712 = vunpack.c.l.b16 %v153
    %v713 = vunpack.c.l.b16 %v154
    %v714 = vunpack.c.l.b16 %v155
    %v715 = vunpack.c.l.b16 %v156
    %v716 = vunpack.c.l.b16 %v157
    %v717 = vunpack.c.l.b16 %v158
    %v718 = vunpack.c.l.b16 %v159
    %v719 = vunpack.c.l.b16 %v160
    %v720 = vunpack.c.l.b16 %v161
    %v721 = vunpack.c.l.b16 %v162
    %v722 = vunpack.c.l.b16 %v163
    %v723 = vunpack.c.l.b16 %v164
    %v724 = vunpack.c.l.b16 %v165
    %v725 = vunpack.c.l.b16 %v166
    %v726 = vunpack.c.l.b16 %v167
    %v727 = vunpack.c.l.b16 %v168
    %v728 = vunpack.c.l.b16 %v169
    %v729 = vunpack.c.l.b16 %v170
    %v730 = vunpack.c.l.b16 %v171
    %v731 = vunpack.c.l.b16 %v172
    %v732 = vunpack.c.l.b16 %v173
    %v733 = vunpack.c.l.b16 %v174
    %v734 = vunpack.c.l.b16 %v175
    %v735 = vunpack.c.l.b16 %v176
    %v736 = vunpack.c.l.b16 %v177
    %v737 = vunpack.c.l.b16 %v178
    %v738 = vunpack.c.l.b16 %v179
    %v739 = vunpack.c.l.b16 %v180
    %v740 = vunpack.c.l.b16 %v181
    %v741 = vunpack.c.l.b16 %v182
    %v742 = vunpack.c.l.b16 %v183
    %v743 = vunpack.c.l.b16 %v184
    %v744 = vunpack.c.l.b16 %v185
    %v745 = vunpack.c.l.b16 %v186
    %v746 = vunpack.c.l.b16 %v187
    %v747 = vunpack.c.l.b16 %v188
    %v748 = vunpack.c.l.b16 %v189
    %v749 = vunpack.c.l.b16 %v190
    %v750 = vunpack.c.l.b16 %v191
    %v751 = vunpack.c.l.b16 %v192
    %v752 = vunpack.c.l.b16 %v193
    %v753 = vunpack.c.l.b16 %v194
    %v754 = vunpack.c.l.b16 %v195
    %v755 = vunpack.c.l.b16 %v196
    %v756 = vunpack.c.l.b16 %v197
    %v757 = vunpack.c.l.b16 %v198
    %v758 = vunpack.c.l.b16 %v199
    %v759 = vunpack.c.l.b16 %v200
    %v760 = vunpack.c.l.b16 %v201
    %v761 = vunpack.c.l.b16 %v202
    %v762 = vunpack.c.l.b16 %v203
    %v763 = vunpack.c.l.b16 %v204
    %v764 = vunpack.c.l.b16 %v205
    %v765 = vunpack.c.l.b16 %v206
    %v766 = vunpack.c.l.b16 %v207
    %v767 = vunpack.c.l.b16 %v208
    %v768 = vunpack.c.l.b16 %v209
    %v769 = vunpack.c.l.b16 %v210
    %v770 = vunpack.c.l.b16 %v211
    %v771 = vunpack.c.l.b16 %v212
    %v772 = vunpack.c.l.b16 %v213
    %v773 = vunpack.c.l.b16 %v214
    %v774 = vunpack.c.l.b16 %v215
    %v775 = vunpack.c.l.b16 %v216
    %v776 = vunpack.c.l.b16 %v217
    %v777 = vunpack.c.l.b16 %v218
    %v778 = vunpack.c.l.b16 %v219
    %v779 = vunpack.c.l.b16 %v220
    %v780 = vunpack.c.l.b16 %v221
    %v781 = vunpack.c.l.b16 %v222
    %v782 = vunpack.c.l.b16 %v223
    %v783 = vunpack.c.l.b16 %v224
    %v784 = vunpack.c.l.b16 %v225
    %v785 = vunpack.c.l.b16 %v226
    %v786 = vunpack.c.l.b16 %v227
    %v787 = vunpack.c.l.b16 %v228
    %v788 = vunpack.c.l.b16 %v229
    %v789 = vunpack.c.l.b16 %v230
    %v790 = vunpack.c.l.b16 %v231
    %v791 = vunpack.c.l.b16 %v232
    %v792 = vunpack.c.l.b16 %v233
    %v793 = vunpack.c.l.b16 %v234
    %v794 = vunpack.c.l.b16 %v235
    %v795 = vunpack.c.l.b16 %v236
    %v796 = vunpack.c.l.b16 %v237
    %v797 = vunpack.c.l.b16 %v238
    %v798 = vunpack.c.l.b16 %v239
    %v799 = vunpack.c.l.b16 %v240
    %v800 = vunpack.c.l.b16 %v241
    %v801 = vunpack.c.l.b16 %v242
    %v802 = vunpack.c.l.b16 %v243
    %v803 = vunpack.c.l.b16 %v244
    %v804 = vunpack.c.l.b16 %v245
    %v805 = vunpack.c.l.b16 %v246
    %v806 = vunpack.c.l.b16 %v247
    %v807 = vunpack.c.l.b16 %v248
    %v808 = vunpack.c.l.b16 %v249
    %v809 = vunpack.c.l.b16 %v250
    %v810 = vunpack.c.l.b16 %v251
    %v811 = vunpack.c.l.b16 %v252
    %v812 = vunpack.c.l.b16 %v253
    %v813 = vunpack.c.l.b16 %v254
    %v814 = vunpack.c.l.b16 %v255
    %v815 = vunpack.c.l.b16 %v256
    %v816 = vunpack.c.l.b16 %v257
    %v817 = vunpack.c.l.b16 %v258
    %v818 = vunpack.c.l.b16 %v259
    %v819 = vunpack.c.l.b16 %v260
    %v820 = vunpack.c.l.b16 %v261
    %v821 = vunpack.c.l.b16 %v262
    %v822 = vunpack.c.l.b16 %v263
    %v823 = vunpack.c.l.b16 %v264
    %v824 = vunpack.c.l.b16 %v265
    %v825 = vunpack.c.l.b16 %v266
    %v826 = vunpack.c.l.b16 %v267
    %v827 = vunpack.c.l.b16 %v268
    %v828 = vunpack.c.l.b16 %v269
    %v829 = vunpack.c.l.b16 %v270
    %v830 = vunpack.c.l.b16 %v271
    %v831 = vunpack.c.l.b16 %v272
    %v832 = vunpack.c.l.b16 %v273
    %v833 = vunpack.c.l.b16 %v274
    %v834 = vunpack.c.l.b16 %v275
    %v835 = vunpack.c.l.b16 %v276
    %v836 = vunpack.c.l.b16 %v277
    %v837 = vunpack.c.l.b16 %v278
    %v838 = vunpack.c.l.b16 %v279
    %v839 = vunpack.c.l.b16 %v280
    %v840 = vunpack.c.l.b16 %v281
    %v841 = vunpack.c.l.b16 %v282
    %v842 = vunpack.c.l.b16 %v283
    %v843 = vunpack.c.l.b16 %v284
    %v844 = vunpack.c.l.b16 %v285
    %v845 = vunpack.c.l.b16 %v286
    %v846 = vunpack.c.l.b16 %v287
    %v847 = vunpack.c.l.b16 %v288
    %v848 = vunpack.c.l.b16 %v289
    %v849 = vunpack.c.l.b16 %v290
    %v850 = vunpack.c.l.b16 %v291
    %v851 = vunpack.c.l.b16 %v292
    %v852 = vunpack.c.l.b16 %v293
    %v853 = vunpack.c.l.b16 %v294
    %v854 = vunpack.c.l.b16 %v295
    %v855 = vunpack.c.l.b16 %v296
    %v856 = vunpack.c.l.b16 %v297
    %v857 = vunpack.c.l.b16 %v298
    %v858 = vunpack.c.l.b16 %v299
    %v859 = vunpack.c.l.b16 %v300
    %v860 = vunpack.c.l.b16 %v301
    %v861 = vunpack.c.l.b16 %v302
    %v862 = vunpack.c.l.b16 %v303
    %v863 = vunpack.c.l.b16 %v304
    %v864 = vunpack.c.l.b16 %v305
    %v865 = vunpack.c.l.b16 %v306
    %v866 = vunpack.c.l.b16 %v307
    %v867 = vunpack.c.l.b16 %v308
    %v868 = vunpack.c.l.b16 %v309
    %v869 = vunpack.c.l.b16 %v310
    %v870 = vunpack.c.l.b16 %v311
    %v871 = vunpack.c.l.b16 %v312
    %v872 = vunpack.c.l.b16 %v313
    %v873 = vunpack.c.l.b16 %v314
    %v874 = vunpack.c.l.b16 %v315
    %v875 = vunpack.c.l.b16 %v316
    %v876 = vunpack.c.l.b16 %v317
    %v877 = vunpack.c.l.b16 %v318
    %v878 = vunpack.c.l.b16 %v319
    %v879 = vunpack.c.l.b16 %v320
    %v880 = vunpack.c.l.b16 %v321
    %v881 = vunpack.c.l.b16 %v322
    %v882 = vunpack.c.l.b16 %v323
    %v883 = vunpack.c.l.b16 %v324
    %v884 = vunpack.c.l.b16 %v325
    %v885 = vunpack.c.l.b16 %v326
    %v886 = vunpack.c.l.b16 %v327
    %v887 = vunpack.c.l.b16 %v328
    %v888 = vunpack.c.l.b16 %v329
    %v889 = vunpack.c.l.b16 %v330
    %v890 = vpack.c.b16 %v635, %v634
    %v891 = vpack.c.b16 %v637, %v636
    %v892 = vpack.c.b16 %v639, %v638
    %v893 = vpack.c.b16 %v641, %v640
    %v894 = vpack.c.b16 %v643, %v642
    %v895 = vpack.c.b16 %v645, %v644
    %v896 = vpack.c.b16 %v647, %v646
    %v897 = vpack.c.b16 %v649, %v648
    %v898 = vpack.c.b16 %v651, %v650
    %v899 = vpack.c.b16 %v653, %v652
    %v900 = vpack.c.b16 %v655, %v654
    %v901 = vpack.c.b16 %v657, %v656
    %v902 = vpack.c.b16 %v659, %v658
    %v903 = vpack.c.b16 %v661, %v660
    %v904 = vpack.c.b16 %v663, %v662
    %v905 = vpack.c.b16 %v665, %v664
    %v906 = vpack.c.b16 %v667, %v666
    %v907 = vpack.c.b16 %v669, %v668
    %v908 = vpack.c.b16 %v671, %v670
    %v909 = vpack.c.b16 %v673, %v672
    %v910 = vpack.c.b16 %v675, %v674
    %v911 = vpack.c.b16 %v677, %v676
    %v912 = vpack.c.b16 %v679, %v678
    %v913 = vpack.c.b16 %v681, %v680
    %v914 = vpack.c.b16 %v683, %v682
    %v915 = vpack.c.b16 %v685, %v684
    %v916 = vpack.c.b16 %v687, %v686
    %v917 = vpack.c.b16 %v689, %v688
    %v918 = vpack.c.b16 %v691, %v690
    %v919 = vpack.c.b16 %v693, %v692
    %v920 = vpack.c.b16 %v695, %v694
    %v921 = vpack.c.b16 %v697, %v696
    %v922 = vpack.c.b16 %v699, %v698
    %v923 = vpack.c.b16 %v701, %v700
    %v924 = vpack.c.b16 %v703, %v702
    %v925 = vpack.c.b16 %v705, %v704
    %v926 = vpack.c.b16 %v707, %v706
    %v927 = vpack.c.b16 %v709, %v708
    %v928 = vpack.c.b16 %v711, %v710
    %v929 = vpack.c.b16 %v713, %v712
    %v930 = vpack.c.b16 %v715, %v714
    %v931 = vpack.c.b16 %v717, %v716
    %v932 = vpack.c.b16 %v719, %v718
    %v933 = vpack.c.b16 %v721, %v720
    %v934 = vpack.c.b16 %v723, %v722
    %v935 = vpack.c.b16 %v725, %v724
    %v936 = vpack.c.b16 %v727, %v726
    %v937 = vpack.c.b16 %v729, %v728
    %v938 = vpack.c.b16 %v731, %v730
    %v939 = vpack.c.b16 %v733, %v732
    %v940 = vpack.c.b16 %v735, %v734
    %v941 = vpack.c.b16 %v737, %v736
    %v942 = vpack.c.b16 %v739, %v738
    %v943 = vpack.c.b16 %v741, %v740
    %v944 = vpack.c.b16 %v743, %v742
    %v945 = vpack.c.b16 %v745, %v744
    %v946 = vpack.c.b16 %v747, %v746
    %v947 = vpack.c.b16 %v749, %v748
    %v948 = vpack.c.b16 %v751, %v750
    %v949 = vpack.c.b16 %v753, %v752
    %v950 = vpack.c.b16 %v755, %v754
    %v951 = vpack.c.b16 %v757, %v756
    %v952 = vpack.c.b16 %v759, %v758
    %v953 = vpack.c.b16 %v761, %v760
    %v954 = vpack.c.b16 %v763, %v762
    %v955 = vpack.c.b16 %v765, %v764
    %v956 = vpack.c.b16 %v767, %v766
    %v957 = vpack.c.b16 %v769, %v768
    %v958 = vpack.c.b16 %v771, %v770
    %v959 = vpack.c.b16 %v773, %v772
    %v960 = vpack.c.b16 %v775, %v774
    %v961 = vpack.c.b16 %v777, %v776
    %v962 = vpack.c.b16 %v779, %v778
    %v963 = vpack.c.b16 %v781, %v780
    %v964 = vpack.c.b16 %v783, %v782
    %v965 = vpack.c.b16 %v785, %v784
    %v966 = vpack.c.b16 %v787, %v786
    %v967 = vpack.c.b16 %v789, %v788
    %v968 = vpack.c.b16 %v791, %v790
    %v969 = vpack.c.b16 %v793, %v792
    %v970 = vpack.c.b16 %v795, %v794
    %v971 = vpack.c.b16 %v797, %v796
    %v972 = vpack.c.b16 %v799, %v798
    %v973 = vpack.c.b16 %v801, %v800
    %v974 = vpack.c.b16 %v803, %v802
    %v975 = vpack.c.b16 %v805, %v804
    %v976 = vpack.c.b16 %v807, %v806
    %v977 = vpack.c.b16 %v809, %v808
    %v978 = vpack.c.b16 %v811, %v810
    %v979 = vpack.c.b16 %v813, %v812
    %v980 = vpack.c.b16 %v815, %v814
    %v981 = vpack.c.b16 %v817, %v816
    %v982 = vpack.c.b16 %v819, %v818
    %v983 = vpack.c.b16 %v821, %v820
    %v984 = vpack.c.b16 %v823, %v822
    %v985 = vpack.c.b16 %v825, %v824
    %v986 = vpack.c.b16 %v827, %v826
    %v987 = vpack.c.b16 %v829, %v828
    %v988 = vpack.c.b16 %v831, %v830
    %v989 = vpack.c.b16 %v833, %v832
    %v990 = vpack.c.b16 %v835, %v834
    %v991 = vpack.c.b16 %v837, %v836
    %v992 = vpack.c.b16 %v839, %v838
    %v993 = vpack.c.b16 %v841, %v840
    %v994 = vpack.c.b16 %v843, %v842
    %v995 = vpack.c.b16 %v845, %v844
    %v996 = vpack.c.b16 %v847, %v846
    %v997 = vpack.c.b16 %v849, %v848
    %v998 = vpack.c.b16 %v851, %v850
    %v999 = vpack.c.b16 %v853, %v852
    %v1000 = vpack.c.b16 %v855, %v854
    %v1001 = vpack.c.b16 %v857, %v856
    %v1002 = vpack.c.b16 %v859, %v858
    %v1003 = vpack.c.b16 %v861, %v860
    %v1004 = vpack.c.b16 %v863, %v862
    %v1005 = vpack.c.b16 %v865, %v864
    %v1006 = vpack.c.b16 %v867, %v866
    %v1007 = vpack.c.b16 %v869, %v868
    %v1008 = vpack.c.b16 %v871, %v870
    %v1009 = vpack.c.b16 %v873, %v872
    %v1010 = vpack.c.b16 %v875, %v874
    %v1011 = vpack.c.b16 %v877, %v876
    %v1012 = vpack.c.b16 %v879, %v878
    %v1013 = vpack.c.b16 %v881, %v880
    %v1014 = vpack.c.b16 %v883, %v882
    %v1015 = vpack.c.b16 %v885, %v884
    %v1016 = vpack.c.b16 %v887, %v886
    %v1017 = vpack.c.b16 %v889, %v888
    %1146 = vmatprep.subr.bf16.mxu0 0
    %1147 = vmatpush1.bf16.msra.mxu0 %v890
    %1148 = vmatprep.subr.bf16.mxu0 0
    %1149 = vmatpush1.bf16.msra.mxu0 %v891
    %1150 = vmatprep.subr.bf16.mxu0 0
    %1151 = vmatpush1.bf16.msra.mxu0 %v892
    %1152 = vmatprep.subr.bf16.mxu0 0
    %1153 = vmatpush1.bf16.msra.mxu0 %v893
    %1154 = vmatprep.subr.bf16.mxu0 0
    %1155 = vmatpush1.bf16.msra.mxu0 %v894
    %1156 = vmatprep.subr.bf16.mxu0 0
    %1157 = vmatpush1.bf16.msra.mxu0 %v895
    %1158 = vmatprep.subr.bf16.mxu0 0
    %1159 = vmatpush1.bf16.msra.mxu0 %v896
    %1160 = vmatprep.subr.bf16.mxu0 0
    %1161 = vmatpush1.bf16.msra.mxu0 %v897
    %1162 = vmatprep.subr.bf16.mxu0 0
    %1163 = vmatpush1.bf16.msra.mxu0 %v898
    %1164 = vmatprep.subr.bf16.mxu0 0
    %1165 = vmatpush1.bf16.msra.mxu0 %v899
    %1166 = vmatprep.subr.bf16.mxu0 0
    %1167 = vmatpush1.bf16.msra.mxu0 %v900
    %1168 = vmatprep.subr.bf16.mxu0 0
    %1169 = vmatpush1.bf16.msra.mxu0 %v901
    %1170 = vmatprep.subr.bf16.mxu0 0
    %1171 = vmatpush1.bf16.msra.mxu0 %v902
    %1172 = vmatprep.subr.bf16.mxu0 0
    %1173 = vmatpush1.bf16.msra.mxu0 %v903
    %1174 = vmatprep.subr.bf16.mxu0 0
    %1175 = vmatpush1.bf16.msra.mxu0 %v904
    %1176 = vmatprep.subr.bf16.mxu0 0
    %1177 = vmatpush1.bf16.msra.mxu0 %v905
    %1178 = vmatprep.mubr.bf16.mxu0 %v356
    %1179 = vmatmul.mubr.bf16.gmra.mrb[0].mxu0 %v355
    %v1180 = vpop.f32.mrb[0].mxu0
    %v1181 = vadd.f32 %v376, %v1180
    %v1182 = vpop.f32.mrb[0].mxu0
    %v1183 = vpop.f32.mrb[0].mxu0
    %v1184 = vpop.f32.mrb[0].mxu0
    %1185 = vdwg.mxu0
    %1186 = vmatprep.subr.bf16.mxu0 0
    %1187 = vmatpush1.bf16.msra.mxu0 %v906
    %1188 = vmatprep.subr.bf16.mxu0 0
    %1189 = vmatpush1.bf16.msra.mxu0 %v907
    %1190 = vmatprep.subr.bf16.mxu0 0
    %1191 = vmatpush1.bf16.msra.mxu0 %v908
    %1192 = vmatprep.subr.bf16.mxu0 0
    %1193 = vmatpush1.bf16.msra.mxu0 %v909
    %1194 = vmatprep.subr.bf16.mxu0 0
    %1195 = vmatpush1.bf16.msra.mxu0 %v910
    %1196 = vmatprep.subr.bf16.mxu0 0
    %1197 = vmatpush1.bf16.msra.mxu0 %v911
    %1198 = vmatprep.subr.bf16.mxu0 0
    %1199 = vmatpush1.bf16.msra.mxu0 %v912
    %1200 = vmatprep.subr.bf16.mxu0 0
    %1201 = vmatpush1.bf16.msra.mxu0 %v913
    %1202 = vmatprep.subr.bf16.mxu0 0
    %1203 = vmatpush1.bf16.msra.mxu0 %v914
    %1204 = vmatprep.subr.bf16.mxu0 0
    %1205 = vmatpush1.bf16.msra.mxu0 %v915
    %1206 = vmatprep.subr.bf16.mxu0 0
    %1207 = vmatpush1.bf16.msra.mxu0 %v916
    %1208 = vmatprep.subr.bf16.mxu0 0
    %1209 = vmatpush1.bf16.msra.mxu0 %v917
    %1210 = vmatprep.subr.bf16.mxu0 0
    %1211 = vmatpush1.bf16.msra.mxu0 %v918
    %1212 = vmatprep.subr.bf16.mxu0 0
    %1213 = vmatpush1.bf16.msra.mxu0 %v919
    %1214 = vmatprep.subr.bf16.mxu0 0
    %1215 = vmatpush1.bf16.msra.mxu0 %v920
    %1216 = vmatprep.subr.bf16.mxu0 0
    %1217 = vmatpush1.bf16.msra.mxu0 %v921
    %1218 = vmatprep.mubr.bf16.mxu0 %v358
    %1219 = vmatmul.mubr.bf16.gmra.mrb[0].mxu0 %v357
    %v1220 = vpop.f32.mrb[0].mxu0
    %v1221 = vadd.f32 %v1181, %v1220
    %v1222 = vpop.f32.mrb[0].mxu0
    %v1223 = vpop.f32.mrb[0].mxu0
    %v1224 = vpop.f32.mrb[0].mxu0
    %1225 = vdwg.mxu0
    %1226 = vmatprep.subr.bf16.mxu0 0
    %1227 = vmatpush1.bf16.msra.mxu0 %v922
    %1228 = vmatprep.subr.bf16.mxu0 0
    %1229 = vmatpush1.bf16.msra.mxu0 %v923
    %1230 = vmatprep.subr.bf16.mxu0 0
    %1231 = vmatpush1.bf16.msra.mxu0 %v924
    %1232 = vmatprep.subr.bf16.mxu0 0
    %1233 = vmatpush1.bf16.msra.mxu0 %v925
    %1234 = vmatprep.subr.bf16.mxu0 0
    %1235 = vmatpush1.bf16.msra.mxu0 %v926
    %1236 = vmatprep.subr.bf16.mxu0 0
    %1237 = vmatpush1.bf16.msra.mxu0 %v927
    %1238 = vmatprep.subr.bf16.mxu0 0
    %1239 = vmatpush1.bf16.msra.mxu0 %v928
    %1240 = vmatprep.subr.bf16.mxu0 0
    %1241 = vmatpush1.bf16.msra.mxu0 %v929
    %1242 = vmatprep.subr.bf16.mxu0 0
    %1243 = vmatpush1.bf16.msra.mxu0 %v930
    %1244 = vmatprep.subr.bf16.mxu0 0
    %1245 = vmatpush1.bf16.msra.mxu0 %v931
    %1246 = vmatprep.subr.bf16.mxu0 0
    %1247 = vmatpush1.bf16.msra.mxu0 %v932
    %1248 = vmatprep.subr.bf16.mxu0 0
    %1249 = vmatpush1.bf16.msra.mxu0 %v933
    %1250 = vmatprep.subr.bf16.mxu0 0
    %1251 = vmatpush1.bf16.msra.mxu0 %v934
    %1252 = vmatprep.subr.bf16.mxu0 0
    %1253 = vmatpush1.bf16.msra.mxu0 %v935
    %1254 = vmatprep.subr.bf16.mxu0 0
    %1255 = vmatpush1.bf16.msra.mxu0 %v936
    %1256 = vmatprep.subr.bf16.mxu0 0
    %1257 = vmatpush1.bf16.msra.mxu0 %v937
    %1258 = vmatprep.mubr.bf16.mxu0 %v360
    %1259 = vmatmul.mubr.bf16.gmra.mrb[0].mxu0 %v359
    %v1260 = vpop.f32.mrb[0].mxu0
    %v1261 = vadd.f32 %v1221, %v1260
    %v1262 = vpop.f32.mrb[0].mxu0
    %v1263 = vpop.f32.mrb[0].mxu0
    %v1264 = vpop.f32.mrb[0].mxu0
    %1265 = vdwg.mxu0
    %1266 = vmatprep.subr.bf16.mxu0 0
    %1267 = vmatpush1.bf16.msra.mxu0 %v938
    %1268 = vmatprep.subr.bf16.mxu0 0
    %1269 = vmatpush1.bf16.msra.mxu0 %v939
    %1270 = vmatprep.subr.bf16.mxu0 0
    %1271 = vmatpush1.bf16.msra.mxu0 %v940
    %1272 = vmatprep.subr.bf16.mxu0 0
    %1273 = vmatpush1.bf16.msra.mxu0 %v941
    %1274 = vmatprep.subr.bf16.mxu0 0
    %1275 = vmatpush1.bf16.msra.mxu0 %v942
    %1276 = vmatprep.subr.bf16.mxu0 0
    %1277 = vmatpush1.bf16.msra.mxu0 %v943
    %1278 = vmatprep.subr.bf16.mxu0 0
    %1279 = vmatpush1.bf16.msra.mxu0 %v944
    %1280 = vmatprep.subr.bf16.mxu0 0
    %1281 = vmatpush1.bf16.msra.mxu0 %v945
    %1282 = vmatprep.subr.bf16.mxu0 0
    %1283 = vmatpush1.bf16.msra.mxu0 %v946
    %1284 = vmatprep.subr.bf16.mxu0 0
    %1285 = vmatpush1.bf16.msra.mxu0 %v947
    %1286 = vmatprep.subr.bf16.mxu0 0
    %1287 = vmatpush1.bf16.msra.mxu0 %v948
    %1288 = vmatprep.subr.bf16.mxu0 0
    %1289 = vmatpush1.bf16.msra.mxu0 %v949
    %1290 = vmatprep.subr.bf16.mxu0 0
    %1291 = vmatpush1.bf16.msra.mxu0 %v950
    %1292 = vmatprep.subr.bf16.mxu0 0
    %1293 = vmatpush1.bf16.msra.mxu0 %v951
    %1294 = vmatprep.subr.bf16.mxu0 0
    %1295 = vmatpush1.bf16.msra.mxu0 %v952
    %1296 = vmatprep.subr.bf16.mxu0 0
    %1297 = vmatpush1.bf16.msra.mxu0 %v953
    %1298 = vmatprep.mubr.bf16.mxu0 %v362
    %1299 = vmatmul.mubr.bf16.gmra.mrb[0].mxu0 %v361
    %v1300 = vpop.f32.mrb[0].mxu0
    %v1301 = vadd.f32 %v1261, %v1300
    %v1302 = vpop.f32.mrb[0].mxu0
    %v1303 = vpop.f32.mrb[0].mxu0
    %v1304 = vpop.f32.mrb[0].mxu0
    %1305 = vdwg.mxu0
    %1306 = vmatprep.subr.bf16.mxu0 0
    %1307 = vmatpush1.bf16.msra.mxu0 %v954
    %1308 = vmatprep.subr.bf16.mxu0 0
    %1309 = vmatpush1.bf16.msra.mxu0 %v955
    %1310 = vmatprep.subr.bf16.mxu0 0
    %1311 = vmatpush1.bf16.msra.mxu0 %v956
    %1312 = vmatprep.subr.bf16.mxu0 0
    %1313 = vmatpush1.bf16.msra.mxu0 %v957
    %1314 = vmatprep.subr.bf16.mxu0 0
    %1315 = vmatpush1.bf16.msra.mxu0 %v958
    %1316 = vmatprep.subr.bf16.mxu0 0
    %1317 = vmatpush1.bf16.msra.mxu0 %v959
    %1318 = vmatprep.subr.bf16.mxu0 0
    %1319 = vmatpush1.bf16.msra.mxu0 %v960
    %1320 = vmatprep.subr.bf16.mxu0 0
    %1321 = vmatpush1.bf16.msra.mxu0 %v961
    %1322 = vmatprep.subr.bf16.mxu0 0
    %1323 = vmatpush1.bf16.msra.mxu0 %v962
    %1324 = vmatprep.subr.bf16.mxu0 0
    %1325 = vmatpush1.bf16.msra.mxu0 %v963
    %1326 = vmatprep.subr.bf16.mxu0 0
    %1327 = vmatpush1.bf16.msra.mxu0 %v964
    %1328 = vmatprep.subr.bf16.mxu0 0
    %1329 = vmatpush1.bf16.msra.mxu0 %v965
    %1330 = vmatprep.subr.bf16.mxu0 0
    %1331 = vmatpush1.bf16.msra.mxu0 %v966
    %1332 = vmatprep.subr.bf16.mxu0 0
    %1333 = vmatpush1.bf16.msra.mxu0 %v967
    %1334 = vmatprep.subr.bf16.mxu0 0
    %1335 = vmatpush1.bf16.msra.mxu0 %v968
    %1336 = vmatprep.subr.bf16.mxu0 0
    %1337 = vmatpush1.bf16.msra.mxu0 %v969
    %1338 = vmatprep.mubr.bf16.mxu0 %v364
    %1339 = vmatmul.mubr.bf16.gmra.mrb[0].mxu0 %v363
    %v1340 = vpop.f32.mrb[0].mxu0
    %v1341 = vadd.f32 %v1301, %v1340
    %v1342 = vpop.f32.mrb[0].mxu0
    %v1343 = vpop.f32.mrb[0].mxu0
    %v1344 = vpop.f32.mrb[0].mxu0
    %1345 = vdwg.mxu0
    %1346 = vmatprep.subr.bf16.mxu0 0
    %1347 = vmatpush1.bf16.msra.mxu0 %v970
    %1348 = vmatprep.subr.bf16.mxu0 0
    %1349 = vmatpush1.bf16.msra.mxu0 %v971
    %1350 = vmatprep.subr.bf16.mxu0 0
    %1351 = vmatpush1.bf16.msra.mxu0 %v972
    %1352 = vmatprep.subr.bf16.mxu0 0
    %1353 = vmatpush1.bf16.msra.mxu0 %v973
    %1354 = vmatprep.subr.bf16.mxu0 0
    %1355 = vmatpush1.bf16.msra.mxu0 %v974
    %1356 = vmatprep.subr.bf16.mxu0 0
    %1357 = vmatpush1.bf16.msra.mxu0 %v975
    %1358 = vmatprep.subr.bf16.mxu0 0
    %1359 = vmatpush1.bf16.msra.mxu0 %v976
    %1360 = vmatprep.subr.bf16.mxu0 0
    %1361 = vmatpush1.bf16.msra.mxu0 %v977
    %1362 = vmatprep.subr.bf16.mxu0 0
    %1363 = vmatpush1.bf16.msra.mxu0 %v978
    %1364 = vmatprep.subr.bf16.mxu0 0
    %1365 = vmatpush1.bf16.msra.mxu0 %v979
    %1366 = vmatprep.subr.bf16.mxu0 0
    %1367 = vmatpush1.bf16.msra.mxu0 %v980
    %1368 = vmatprep.subr.bf16.mxu0 0
    %1369 = vmatpush1.bf16.msra.mxu0 %v981
    %1370 = vmatprep.subr.bf16.mxu0 0
    %1371 = vmatpush1.bf16.msra.mxu0 %v982
    %1372 = vmatprep.subr.bf16.mxu0 0
    %1373 = vmatpush1.bf16.msra.mxu0 %v983
    %1374 = vmatprep.subr.bf16.mxu0 0
    %1375 = vmatpush1.bf16.msra.mxu0 %v984
    %1376 = vmatprep.subr.bf16.mxu0 0
    %1377 = vmatpush1.bf16.msra.mxu0 %v985
    %1378 = vmatprep.mubr.bf16.mxu0 %v366
    %1379 = vmatmul.mubr.bf16.gmra.mrb[0].mxu0 %v365
    %v1380 = vpop.f32.mrb[0].mxu0
    %v1381 = vadd.f32 %v1341, %v1380
    %v1382 = vpop.f32.mrb[0].mxu0
    %v1383 = vpop.f32.mrb[0].mxu0
    %v1384 = vpop.f32.mrb[0].mxu0
    %1385 = vdwg.mxu0
    %1386 = vmatprep.subr.bf16.mxu0 0
    %1387 = vmatpush1.bf16.msra.mxu0 %v986
    %1388 = vmatprep.subr.bf16.mxu0 0
    %1389 = vmatpush1.bf16.msra.mxu0 %v987
    %1390 = vmatprep.subr.bf16.mxu0 0
    %1391 = vmatpush1.bf16.msra.mxu0 %v988
    %1392 = vmatprep.subr.bf16.mxu0 0
    %1393 = vmatpush1.bf16.msra.mxu0 %v989
    %1394 = vmatprep.subr.bf16.mxu0 0
    %1395 = vmatpush1.bf16.msra.mxu0 %v990
    %1396 = vmatprep.subr.bf16.mxu0 0
    %1397 = vmatpush1.bf16.msra.mxu0 %v991
    %1398 = vmatprep.subr.bf16.mxu0 0
    %1399 = vmatpush1.bf16.msra.mxu0 %v992
    %1400 = vmatprep.subr.bf16.mxu0 0
    %1401 = vmatpush1.bf16.msra.mxu0 %v993
    %1402 = vmatprep.subr.bf16.mxu0 0
    %1403 = vmatpush1.bf16.msra.mxu0 %v994
    %1404 = vmatprep.subr.bf16.mxu0 0
    %1405 = vmatpush1.bf16.msra.mxu0 %v995
    %1406 = vmatprep.subr.bf16.mxu0 0
    %1407 = vmatpush1.bf16.msra.mxu0 %v996
    %1408 = vmatprep.subr.bf16.mxu0 0
    %1409 = vmatpush1.bf16.msra.mxu0 %v997
    %1410 = vmatprep.subr.bf16.mxu0 0
    %1411 = vmatpush1.bf16.msra.mxu0 %v998
    %1412 = vmatprep.subr.bf16.mxu0 0
    %1413 = vmatpush1.bf16.msra.mxu0 %v999
    %1414 = vmatprep.subr.bf16.mxu0 0
    %1415 = vmatpush1.bf16.msra.mxu0 %v1000
    %1416 = vmatprep.subr.bf16.mxu0 0
    %1417 = vmatpush1.bf16.msra.mxu0 %v1001
    %1418 = vmatprep.mubr.bf16.mxu0 %v368
    %1419 = vmatmul.mubr.bf16.gmra.mrb[0].mxu0 %v367
    %v1420 = vpop.f32.mrb[0].mxu0
    %v1421 = vadd.f32 %v1381, %v1420
    %v1422 = vpop.f32.mrb[0].mxu0
    %v1423 = vpop.f32.mrb[0].mxu0
    %v1424 = vpop.f32.mrb[0].mxu0
    %1425 = vdwg.mxu0
    %1426 = vmatprep.subr.bf16.mxu0 0
    %1427 = vmatpush1.bf16.msra.mxu0 %v1002
    %1428 = vmatprep.subr.bf16.mxu0 0
    %1429 = vmatpush1.bf16.msra.mxu0 %v1003
    %1430 = vmatprep.subr.bf16.mxu0 0
    %1431 = vmatpush1.bf16.msra.mxu0 %v1004
    %1432 = vmatprep.subr.bf16.mxu0 0
    %1433 = vmatpush1.bf16.msra.mxu0 %v1005
    %1434 = vmatprep.subr.bf16.mxu0 0
    %1435 = vmatpush1.bf16.msra.mxu0 %v1006
    %1436 = vmatprep.subr.bf16.mxu0 0
    %1437 = vmatpush1.bf16.msra.mxu0 %v1007
    %1438 = vmatprep.subr.bf16.mxu0 0
    %1439 = vmatpush1.bf16.msra.mxu0 %v1008
    %1440 = vmatprep.subr.bf16.mxu0 0
    %1441 = vmatpush1.bf16.msra.mxu0 %v1009
    %1442 = vmatprep.subr.bf16.mxu0 0
    %1443 = vmatpush1.bf16.msra.mxu0 %v1010
    %1444 = vmatprep.subr.bf16.mxu0 0
    %1445 = vmatpush1.bf16.msra.mxu0 %v1011
    %1446 = vmatprep.subr.bf16.mxu0 0
    %1447 = vmatpush1.bf16.msra.mxu0 %v1012
    %1448 = vmatprep.subr.bf16.mxu0 0
    %1449 = vmatpush1.bf16.msra.mxu0 %v1013
    %1450 = vmatprep.subr.bf16.mxu0 0
    %1451 = vmatpush1.bf16.msra.mxu0 %v1014
    %1452 = vmatprep.subr.bf16.mxu0 0
    %1453 = vmatpush1.bf16.msra.mxu0 %v1015
    %1454 = vmatprep.subr.bf16.mxu0 0
    %1455 = vmatpush1.bf16.msra.mxu0 %v1016
    %1456 = vmatprep.subr.bf16.mxu0 0
    %1457 = vmatpush1.bf16.msra.mxu0 %v1017
    %1458 = vmatprep.mubr.bf16.mxu0 %v370
    %1459 = vmatmul.mubr.bf16.gmra.mrb[0].mxu0 %v369
    %v1460 = vpop.f32.mrb[0].mxu0
    %v1461 = vadd.f32 %v1421, %v1460
    %v1462 = vpop.f32.mrb[0].mxu0
    %v1463 = vpop.f32.mrb[0].mxu0
    %v1464 = vpop.f32.mrb[0].mxu0
    %1465 = vdwg.mxu0
    %vm1466 = vcmask 1043456
    %v1467 = vsel %vm1466, %v1461, 0.0
    %v1468 = vrot.slane %v1467, 4
    %v1469 = vadd.f32 %v1467, %v1468
    %v1470 = vrot.slane %v1469, 2
    %v1471 = vadd.f32 %v1469, %v1470
    %v1472 = vrot.slane %v1471, 1
    %v1473 = vadd.f32 %v1471, %v1472
    %v1474 = vrcp.pop 4.0
    %v1475 = vmul.f32 %v1473, %v1474
    %v1476 = vsub.f32 %v1461, %v1475
    %v1477 = vmul.f32 %v1476, %v1476
    %v1478 = vsel %vm1466, %v1477, 0.0
    %v1479 = vrot.slane %v1478, 4
    %v1480 = vadd.f32 %v1478, %v1479
    %v1481 = vrot.slane %v1480, 2
    %v1482 = vadd.f32 %v1480, %v1481
    %v1483 = vrot.slane %v1482, 1
    %v1484 = vadd.f32 %v1482, %v1483
    %v1485 = vmul.f32 %v1484, %v1474
    %v1486 = vadd.f32 %v1485, 1e-05
    %v1487 = vrsqrt.pop %v1486
    %v1488 = vmul.f32 %v1476, %v1487
    %v1489 = vld [vmem:[%s3] sm:$0x1]
    %v1491 = vlaneseq
    %v1492 = vshrl.u32 %v1491, 7
    %v1493 = vsub.s32 0, %v1492
    %v1494 = vrot.slane %v1489, %v1493
    %v1496 = vmul.f32 %v1488, %v1494
    %v1497 = vld [vmem:[%s4] sm:$0x1]
    %v1499 = vlaneseq
    %v1500 = vshrl.u32 %v1499, 7
    %v1501 = vsub.s32 0, %v1500
    %v1502 = vrot.slane %v1497, %v1501
    %v1504 = vadd.f32 %v1496, %v1502
    %v1505 = vld [vmem:[#allocation7] sm:$0xf]
    %v1506 = vld [vmem:[#allocation7 + $0x4] sm:$0xf]
    %v1507 = vld [vmem:[#allocation7 + $0x8] sm:$0xf]
    %v1508 = vld [vmem:[#allocation7 + $0xc] sm:$0xf]
    %v1509 = vld [vmem:[#allocation7 + $0x10] sm:$0xf]
    %v1510 = vld [vmem:[#allocation7 + $0x14] sm:$0xf]
    %v1511 = vld [vmem:[#allocation7 + $0x18] sm:$0xf]
    %v1512 = vld [vmem:[#allocation7 + $0x1c] sm:$0xf]
    %v1513 = vld [vmem:[#allocation7 + $0x20] sm:$0xf]
    %v1514 = vld [vmem:[#allocation7 + $0x24] sm:$0xf]
    %v1515 = vld [vmem:[#allocation7 + $0x28] sm:$0xf]
    %v1516 = vld [vmem:[#allocation7 + $0x2c] sm:$0xf]
    %v1517 = vld [vmem:[#allocation7 + $0x30] sm:$0xf]
    %v1518 = vld [vmem:[#allocation7 + $0x34] sm:$0xf]
    %v1519 = vld [vmem:[#allocation7 + $0x38] sm:$0xf]
    %v1520 = vld [vmem:[#allocation7 + $0x3c] sm:$0xf]
    %v1521 = vpack.c.bf16 %v1504, %v1504
    %v1522 = vld [vmem:[%s6] sm:$0x1]
    %v1524 = vlaneseq
    %v1525 = vshrl.u32 %v1524, 7
    %v1526 = vsub.s32 0, %v1525
    %v1527 = vrot.slane %v1522, %v1526
    %v1545 = vunpack.c.l.b16 %v1505
    %v1546 = vunpack.c.l.b16 %v1506
    %v1547 = vunpack.c.l.b16 %v1507
    %v1548 = vunpack.c.l.b16 %v1508
    %v1549 = vunpack.c.l.b16 %v1509
    %v1550 = vunpack.c.l.b16 %v1510
    %v1551 = vunpack.c.l.b16 %v1511
    %v1552 = vunpack.c.l.b16 %v1512
    %v1553 = vunpack.c.l.b16 %v1513
    %v1554 = vunpack.c.l.b16 %v1514
    %v1555 = vunpack.c.l.b16 %v1515
    %v1556 = vunpack.c.l.b16 %v1516
    %v1557 = vunpack.c.l.b16 %v1517
    %v1558 = vunpack.c.l.b16 %v1518
    %v1559 = vunpack.c.l.b16 %v1519
    %v1560 = vunpack.c.l.b16 %v1520
    %v1561 = vpack.c.b16 %v1546, %v1545
    %v1562 = vpack.c.b16 %v1548, %v1547
    %v1563 = vpack.c.b16 %v1550, %v1549
    %v1564 = vpack.c.b16 %v1552, %v1551
    %v1565 = vpack.c.b16 %v1554, %v1553
    %v1566 = vpack.c.b16 %v1556, %v1555
    %v1567 = vpack.c.b16 %v1558, %v1557
    %v1568 = vpack.c.b16 %v1560, %v1559
    %1577 = vmatprep.subr.bf16.mxu0 0
    %1578 = vmatpush1.bf16.msra.mxu0 %v1561
    %1579 = vmatprep.subr.bf16.mxu0 0
    %1580 = vmatpush1.bf16.msra.mxu0 %v1562
    %1581 = vmatprep.subr.bf16.mxu0 0
    %1582 = vmatpush1.bf16.msra.mxu0 %v1563
    %1583 = vmatprep.subr.bf16.mxu0 0
    %1584 = vmatpush1.bf16.msra.mxu0 %v1564
    %1585 = vmatprep.subr.bf16.mxu0 0
    %1586 = vmatpush1.bf16.msra.mxu0 %v1565
    %1587 = vmatprep.subr.bf16.mxu0 0
    %1588 = vmatpush1.bf16.msra.mxu0 %v1566
    %1589 = vmatprep.subr.bf16.mxu0 0
    %1590 = vmatpush1.bf16.msra.mxu0 %v1567
    %1591 = vmatprep.subr.bf16.mxu0 0
    %1592 = vmatpush1.bf16.msra.mxu0 %v1568
    %1593 = vmatprep.subr.bf16.mxu0 0
    %1594 = vmatpush1.bf16.msra.mxu0 0
    %1595 = vmatprep.subr.bf16.mxu0 0
    %1596 = vmatpush1.bf16.msra.mxu0 0
    %1597 = vmatprep.subr.bf16.mxu0 0
    %1598 = vmatpush1.bf16.msra.mxu0 0
    %1599 = vmatprep.subr.bf16.mxu0 0
    %1600 = vmatpush1.bf16.msra.mxu0 0
    %1601 = vmatprep.subr.bf16.mxu0 0
    %1602 = vmatpush1.bf16.msra.mxu0 0
    %1603 = vmatprep.subr.bf16.mxu0 0
    %1604 = vmatpush1.bf16.msra.mxu0 0
    %1605 = vmatprep.subr.bf16.mxu0 0
    %1606 = vmatpush1.bf16.msra.mxu0 0
    %1607 = vmatprep.subr.bf16.mxu0 0
    %1608 = vmatpush1.bf16.msra.mxu0 0
    %1609 = vmatprep.mubr.bf16.mxu0 0
    %1610 = vmatmul.mubr.bf16.gmra.mrb[0].mxu0 %v1521
    %v1611 = vpop.f32.mrb[0].mxu0
    %v1612 = vadd.f32 %v1527, %v1611
    %v1613 = vpop.f32.mrb[0].mxu0
    %v1614 = vpop.f32.mrb[0].mxu0
    %v1615 = vpop.f32.mrb[0].mxu0
    %1616 = vdwg.mxu0
    %1617 = vst [vmem:[#allocation8] sm:$0xf] %v1612
    // Predicated region
    $region42: #{tpu_custom_call.1} parent=1 // pred_check
      _
    $region43: #{tpu_custom_call.1} parent=1 // pred_check_branch
      %1619 = sbr.rel (0) target = $region45
    $region44: #{tpu_custom_call.1} parent=1 // pred_region
      %s1621 = ssub.s32 64, 64
      %1622 = vsyncadd [#allocation4], %s1621
      %s1624 = sshll.u32 [#allocation8], 4
      %s1625 = int_to_ptr.vmem [resolvable:$true] %s1624
      %1627 = dma.vmem_to_hbm [thread:$0]  %s1625, 64, %s7, [#allocation4]
    $region45: #{tpu_custom_call.1} parent=1 // pred_fallthru
      _
    // Predicated region
    $region46: #{tpu_custom_call.1} parent=1 // pred_check
      _
    $region47: #{tpu_custom_call.1} parent=1 // pred_check_branch
      %1629 = sbr.rel (0) target = $region49
    $region48: #{tpu_custom_call.1} parent=1 // pred_region
      %1630 = dma.done [#allocation4], 64
    $region49: #{tpu_custom_call.1} parent=1 // pred_fallthru
      _
    %1631 = vsyncpa [#allocation3], 1
    %1632 = vsyncpa [#allocation6], 1
    %1633 = vsyncpa [#allocation4], 1

</llo_original>
